<compile_context>
chip_gen: v6e
topology: v6e:2x2x1
jax: 0.10.0
libtpu: 0.0.40
codegen_flags: <defaults>
</compile_context>

<pallas_src>
import functools

import jax
import jax.numpy as jnp
from jax.experimental import pallas as pl
from jax.experimental.pallas import tpu as pltpu

N_IN = 3     # rnn input features (xin[:, :3])
N_FEAT = 5   # total feature columns of X (xin[:, 3:5] = target position)
N_OUT = 2    # n_outputs


def rnn_kernel(h0_ref, v0_ref, drive_ref, tgt_ref,
               whh_ref, wfb_ref, wout_ref,
               hidden_out_ref, poserr_out_ref,
               x1_s, v1_s,
               *, one_minus_alpha, tc):
    c = pl.program_id(0)
    B = h0_ref.shape[0]
    N = whh_ref.shape[0]

    whh = whh_ref[...]     # alpha * (mask2 * W_hh)^T            (N, N)
    wout = wout_ref[...]   # dt * W_out^T                        (N, 2)
    # Hoisted (1,N)->(B,N) broadcasts of the two feedback rows (JAX does not
    # CSE broadcast_in_dim, so do it once per chunk, not once per step).
    wfb0 = jnp.broadcast_to(wfb_ref[0:1, :], (B, N))   # alpha*(mask*W_fb)^T row 0
    wfb1 = jnp.broadcast_to(wfb_ref[1:2, :], (B, N))   # alpha*(mask*W_fb)^T row 1

    @pl.when(c == 0)
    def _():
        # hidden init + pre-loop warm-up step (fwd_delay=0 -> exactly one
        # step, zero position-error feedback).  Uses drive[0]/tgt[0].
        x0 = h0_ref[...]
        r0 = jnp.maximum(x0, 0.0)
        x1 = (one_minus_alpha * x0
              + jnp.dot(r0, whh, preferred_element_type=jnp.float32)
              + drive_ref[0])
        r1 = jnp.maximum(x1, 0.0)
        v1 = (v0_ref[...] + tgt_ref[0]
              - jnp.dot(r1, wout, preferred_element_type=jnp.float32))
        x1_s[...] = x1
        v1_s[...] = v1

    x1 = x1_s[...]
    r1 = jnp.maximum(x1, 0.0)
    v1 = v1_s[...]

    # Fully-unrolled static inner time loop over the chunk.
    for t in range(tc):
        # fb_delay = fwd_delay = 0: zero feedback only at global step 0,
        # otherwise the most recently carried position error v1.
        if t == 0:
            v1fb = jnp.where(c == 0, jnp.zeros_like(v1), v1)
        else:
            v1fb = v1
        # K=2 feedback "matmul" as two VPU broadcast-FMAs (keeps MXU free).
        fb = v1fb[:, 0:1] * wfb0 + v1fb[:, 1:2] * wfb1
        x1 = (one_minus_alpha * x1
              + jnp.dot(r1, whh, preferred_element_type=jnp.float32)
              + fb + drive_ref[t])
        r1 = jnp.maximum(x1, 0.0)          # relu nonlinearity
        v1 = (v1 + tgt_ref[t]
              - jnp.dot(r1, wout, preferred_element_type=jnp.float32))
        hidden_out_ref[t] = r1
        poserr_out_ref[t] = v1

    x1_s[...] = x1
    v1_s[...] = v1


def rnn_forward(X, Xpert, popto, h0,
                w_ih, w_hh, w_fb, b_fb, w_out, b_out, mask, mask2,
                alpha, dt, time_chunk=4):
    T, B, _ = X.shape
    N = w_hh.shape[0]
    alpha = float(alpha)
    dt = float(dt)
    f32 = jnp.float32

    # Glue: fold masks + alpha/dt scalings into the weights and pre-transpose
    # so every in-kernel matmul is (B, K) @ (K, N_lane).
    whh_a_t = (alpha * (mask2 * w_hh).T).astype(f32)      # (N, N)
    wfb_a_t = (alpha * (mask * w_fb).T).astype(f32)       # (2, N)
    wout_dt_t = (dt * w_out.T).astype(f32)                # (N, 2)

    # Hoisted input projection + biases + popto (one big matmul, not T tiny
    # ones on the serial critical path).
    drive = (alpha * (X[:, :, :N_IN] @ w_ih.T
                      + b_fb[None, None, :] + popto)).astype(f32)     # (T,B,N)
    tgt = (dt * (X[:, :, N_IN:N_FEAT] - Xpert
                 - b_out[None, None, :])).astype(f32)                 # (T,B,2)

    # Initial position error v0 = output(relu(h0)).
    v0 = (jnp.maximum(h0, 0.0) @ w_out.T + b_out[None, :]).astype(f32)

    # Time chunking (pad T up to a multiple of the chunk; padded steps only
    # produce discarded trailing outputs since the recurrence is causal).
    tc = max(1, min(int(time_chunk), T))
    n_chunks = -(-T // tc)
    t_pad = n_chunks * tc
    if t_pad != T:
        pad = ((0, t_pad - T), (0, 0), (0, 0))
        drive = jnp.pad(drive, pad)
        tgt = jnp.pad(tgt, pad)

    kernel = functools.partial(rnn_kernel,
                               one_minus_alpha=1.0 - alpha, tc=tc)

    grid_spec = pltpu.PrefetchScalarGridSpec(
        num_scalar_prefetch=0,
        grid=(n_chunks,),
        in_specs=[
            pl.BlockSpec((B, N), lambda c: (0, 0)),              # h0
            pl.BlockSpec((B, N_OUT), lambda c: (0, 0)),          # v0
            pl.BlockSpec((tc, B, N), lambda c: (c, 0, 0)),       # drive chunk
            pl.BlockSpec((tc, B, N_OUT), lambda c: (c, 0, 0)),   # tgt chunk
            pl.BlockSpec((N, N), lambda c: (0, 0)),              # alpha*(mask2*Whh)^T
            pl.BlockSpec((N_OUT, N), lambda c: (0, 0)),          # alpha*(mask*Wfb)^T
            pl.BlockSpec((N, N_OUT), lambda c: (0, 0)),          # dt*Wout^T
        ],
        out_specs=[
            pl.BlockSpec((tc, B, N), lambda c: (c, 0, 0)),       # hidden1 chunk
            pl.BlockSpec((tc, B, N_OUT), lambda c: (c, 0, 0)),   # poserr chunk
        ],
        scratch_shapes=[
            pltpu.VMEM((B, N), f32),       # x1 state (carried across chunks)
            pltpu.VMEM((B, N_OUT), f32),   # v1 state
        ],
    )

    hidden1, poserr = pl.pallas_call(
        kernel,
        out_shape=(jax.ShapeDtypeStruct((t_pad, B, N), f32),
                   jax.ShapeDtypeStruct((t_pad, B, N_OUT), f32)),
        grid_spec=grid_spec,
        compiler_params=pltpu.CompilerParams(
            dimension_semantics=("arbitrary",)),   # recurrence is sequential
    )(h0.astype(f32), v0, drive, tgt, whh_a_t, wfb_a_t, wout_dt_t)

    # PyTorch forward returns (poserr, hidden1) when fwd_delay == 0.
    return poserr[:T], hidden1[:T]


def rnn_forward_ref(X, Xpert, popto, h0,
                    w_ih, w_hh, w_fb, b_fb, w_out, b_out, mask, mask2,
                    alpha, dt):
    """Pure-JAX replica of the PyTorch forward (fwd_delay=fb_delay=0, no noise)."""
    whh_eff_t = (mask2 * w_hh).T
    wfb_eff_t = (mask * w_fb).T

    def f_step(xin, x1, r1, v1fb, v1, pin, pop):
        x1 = x1 + alpha * (-x1 + r1 @ whh_eff_t + xin[:, :N_IN] @ w_ih.T
                           + v1fb @ wfb_eff_t + b_fb + pop)
        r1 = jnp.maximum(x1, 0.0)
        vt = r1 @ w_out.T + b_out + pin
        v1 = v1 + dt * (xin[:, N_IN:N_FEAT] - vt)
        return x1, r1, v1

    x1 = h0
    r1 = jnp.maximum(x1, 0.0)
    v1 = r1 @ w_out.T + b_out
    hidden1, poserr = [], []
    # pre-loop (fwd_delay + 1 = 1 iteration), zero feedback
    x1, r1, v1 = f_step(X[0], x1, r1, v1 * 0.0, v1, Xpert[0], popto[0])
    hidden1.append(r1)
    poserr.append(v1)
    T = X.shape[0]
    for j in range(T):
        v1fb = v1 * 0.0 if j <= 0 else poserr[j]   # delay = 0
        x1, r1, v1 = f_step(X[j], x1, r1, v1fb, v1, Xpert[j], popto[j])
        hidden1.append(r1)
        poserr.append(v1)
    return jnp.stack(poserr[1:]), jnp.stack(hidden1[1:])


if __name__ == "__main__":
    # Module config (small, deterministic).
    n_inputs, n_outputs, n_neurons = N_IN, N_OUT, 32
    alpha, dt = 0.1, 0.1
    T, B = 8, 2

    key = jax.random.PRNGKey(0)
    ks = jax.random.split(key, 10)

    # Deterministic synthetic parameters (shapes from nn.RNN / nn.Linear).
    w_ih = 0.1 * jax.random.normal(ks[0], (n_neurons, n_inputs), jnp.float32)
    w_hh = 0.1 * jax.random.normal(ks[1], (n_neurons, n_neurons), jnp.float32)
    w_out = 0.1 * jax.random.normal(ks[2], (n_outputs, n_neurons), jnp.float32)
    b_out = 0.1 * jax.random.normal(ks[3], (n_outputs,), jnp.float32)
    w_fb = 0.1 * jax.random.normal(ks[4], (n_neurons, n_outputs), jnp.float32)
    b_fb = 0.1 * jax.random.normal(ks[5], (n_neurons,), jnp.float32)
    mask = jnp.ones((n_neurons, n_outputs), jnp.float32)    # fb_sparsity = 1
    mask2 = jnp.ones((n_neurons, n_neurons), jnp.float32)   # rec_sparsity = 1

    # Inputs.
    X = jax.random.normal(ks[6], (T, B, N_FEAT), jnp.float32)
    Xpert = 0.1 * jax.random.normal(ks[7], (T, B, N_OUT), jnp.float32)
    popto = jnp.zeros((T, B, n_neurons), jnp.float32)
    # init_hidden(): (rand(batch, n_neurons) - 0.5) * 0.2
    h0 = (jax.random.uniform(ks[8], (B, n_neurons), jnp.float32) - 0.5) * 0.2

    poserr, hidden1 = rnn_forward(X, Xpert, popto, h0,
                                  w_ih, w_hh, w_fb, b_fb, w_out, b_out,
                                  mask, mask2, alpha, dt, time_chunk=4)
    jax.block_until_ready((poserr, hidden1))

    poserr_ref, hidden1_ref = rnn_forward_ref(X, Xpert, popto, h0,
                                              w_ih, w_hh, w_fb, b_fb,
                                              w_out, b_out, mask, mask2,
                                              alpha, dt)
    assert poserr.shape == (T, B, N_OUT)
    assert hidden1.shape == (T, B, n_neurons)
    assert jnp.allclose(poserr, poserr_ref, atol=2e-3, rtol=2e-3)
    assert jnp.allclose(hidden1, hidden1_ref, atol=2e-3, rtol=2e-3)

    # TODO(synk): biolearning weight update (dW/outer-product accumulation) and
    # noisein/noiseout conv1d noise paths are host-RNG-driven training-time
    # options and are not implemented in the kernel (disabled here).
    print("KERNEL_OK")
</pallas_src>

<mosaic_0001>
module attributes {stable_mosaic.version = 11 : i64} {
  func.func @rnn_kernel(%arg0: i32, %arg1: memref<2x32xf32, #tpu.memory_space<vmem>>, %arg2: memref<2x2xf32, #tpu.memory_space<vmem>>, %arg3: memref<4x2x32xf32, #tpu.memory_space<vmem>>, %arg4: memref<4x2x2xf32, #tpu.memory_space<vmem>>, %arg5: memref<32x32xf32, #tpu.memory_space<vmem>>, %arg6: memref<2x32xf32, #tpu.memory_space<vmem>>, %arg7: memref<32x2xf32, #tpu.memory_space<vmem>>, %arg8: memref<4x2x32xf32, #tpu.memory_space<vmem>>, %arg9: memref<4x2x2xf32, #tpu.memory_space<vmem>>, %arg10: memref<2x32xf32, #tpu.memory_space<vmem>>, %arg11: memref<2x2xf32, #tpu.memory_space<vmem>>) attributes {dimension_semantics = [#tpu.dimension_semantics<arbitrary>], iteration_bounds = array<i64: 2>, scalar_prefetch = 0 : i64, scratch_operands = 2 : i64, tpu.core_type = #tpu.core_type<tc>, window_params = [{pipeline_mode = #tpu.pipeline_mode<synchronous>, transform_indices = @transform_0, window_bounds = array<i64: 2, 32>}, {pipeline_mode = #tpu.pipeline_mode<synchronous>, transform_indices = @transform_1, window_bounds = array<i64: 2, 2>}, {transform_indices = @transform_2, window_bounds = array<i64: 4, 2, 32>}, {transform_indices = @transform_3, window_bounds = array<i64: 4, 2, 2>}, {pipeline_mode = #tpu.pipeline_mode<synchronous>, transform_indices = @transform_4, window_bounds = array<i64: 32, 32>}, {pipeline_mode = #tpu.pipeline_mode<synchronous>, transform_indices = @transform_5, window_bounds = array<i64: 2, 32>}, {pipeline_mode = #tpu.pipeline_mode<synchronous>, transform_indices = @transform_6, window_bounds = array<i64: 32, 2>}, {transform_indices = @transform_7, window_bounds = array<i64: 4, 2, 32>}, {transform_indices = @transform_8, window_bounds = array<i64: 4, 2, 2>}]} {
    %c0 = arith.constant 0 : index
    %c0_0 = arith.constant 0 : index
    %0 = vector.load %arg5[%c0, %c0_0] : memref<32x32xf32, #tpu.memory_space<vmem>>, vector<32x32xf32>
    %c0_1 = arith.constant 0 : index
    %c0_2 = arith.constant 0 : index
    %1 = vector.load %arg7[%c0_1, %c0_2] : memref<32x2xf32, #tpu.memory_space<vmem>>, vector<32x2xf32>
    %c0_3 = arith.constant 0 : index
    %c0_4 = arith.constant 0 : index
    %2 = vector.load %arg6[%c0_3, %c0_4] : memref<2x32xf32, #tpu.memory_space<vmem>>, vector<1x32xf32>
    %3 = vector.shape_cast %2 : vector<1x32xf32> to vector<1x32xf32>
    %4 = vector.broadcast %3 : vector<1x32xf32> to vector<2x32xf32>
    %c1 = arith.constant 1 : index
    %c0_5 = arith.constant 0 : index
    %5 = vector.load %arg6[%c1, %c0_5] : memref<2x32xf32, #tpu.memory_space<vmem>>, vector<1x32xf32>
    %6 = vector.shape_cast %5 : vector<1x32xf32> to vector<1x32xf32>
    %7 = vector.broadcast %6 : vector<1x32xf32> to vector<2x32xf32>
    %c0_i32 = arith.constant 0 : i32
    %8 = arith.cmpi eq, %arg0, %c0_i32 : i32
    %9 = arith.extui %8 : i1 to i32
    %c0_i32_6 = arith.constant 0 : i32
    %10 = arith.cmpi ne, %9, %c0_i32_6 : i32
    scf.if %10 {
      %c0_79 = arith.constant 0 : index
      %c0_80 = arith.constant 0 : index
      %132 = vector.load %arg1[%c0_79, %c0_80] : memref<2x32xf32, #tpu.memory_space<vmem>>, vector<2x32xf32>
      %cst_81 = arith.constant 0.000000e+00 : f32
      %133 = vector.broadcast %cst_81 : f32 to vector<2x32xf32>
      %134 = arith.maximumf %132, %133 : vector<2x32xf32>
      %cst_82 = arith.constant 0.899999976 : f32
      %135 = vector.broadcast %cst_82 : f32 to vector<2x32xf32>
      %136 = arith.mulf %135, %132 : vector<2x32xf32>
      %cst_83 = arith.constant dense<0.000000e+00> : vector<2x32xf32>
      %137 = tpu.matmul %134, %0, %cst_83 {dimension_numbers = #tpu.dot_dimension_numbers<[1], [0], [0], [1], [0, 0, 1, 1], [], []>} : vector<2x32xf32>, vector<32x32xf32>, vector<2x32xf32> -> vector<2x32xf32>
      %138 = arith.addf %136, %137 : vector<2x32xf32>
      %c0_84 = arith.constant 0 : index
      %c0_85 = arith.constant 0 : index
      %c0_86 = arith.constant 0 : index
      %139 = vector.load %arg3[%c0_84, %c0_85, %c0_86] : memref<4x2x32xf32, #tpu.memory_space<vmem>>, vector<1x2x32xf32>
      %140 = vector.shape_cast %139 : vector<1x2x32xf32> to vector<2x32xf32>
      %141 = arith.addf %138, %140 : vector<2x32xf32>
      %cst_87 = arith.constant 0.000000e+00 : f32
      %142 = vector.broadcast %cst_87 : f32 to vector<2x32xf32>
      %143 = arith.maximumf %141, %142 : vector<2x32xf32>
      %c0_88 = arith.constant 0 : index
      %c0_89 = arith.constant 0 : index
      %144 = vector.load %arg2[%c0_88, %c0_89] : memref<2x2xf32, #tpu.memory_space<vmem>>, vector<2x2xf32>
      %c0_90 = arith.constant 0 : index
      %c0_91 = arith.constant 0 : index
      %c0_92 = arith.constant 0 : index
      %145 = vector.load %arg4[%c0_90, %c0_91, %c0_92] : memref<4x2x2xf32, #tpu.memory_space<vmem>>, vector<1x2x2xf32>
      %146 = vector.shape_cast %145 : vector<1x2x2xf32> to vector<2x2xf32>
      %147 = arith.addf %144, %146 : vector<2x2xf32>
      %cst_93 = arith.constant dense<0.000000e+00> : vector<2x2xf32>
      %148 = tpu.matmul %143, %1, %cst_93 {dimension_numbers = #tpu.dot_dimension_numbers<[1], [0], [0], [1], [0, 0, 1, 1], [], []>} : vector<2x32xf32>, vector<32x2xf32>, vector<2x2xf32> -> vector<2x2xf32>
      %149 = arith.subf %147, %148 : vector<2x2xf32>
      %c0_94 = arith.constant 0 : index
      %c0_95 = arith.constant 0 : index
      %150 = vector.load %arg10[%c0_94, %c0_95] : memref<2x32xf32, #tpu.memory_space<vmem>>, vector<2x32xf32>
      tpu.vector_store %arg10[%c0_94, %c0_95], %141 {strides = array<i32>} : memref<2x32xf32, #tpu.memory_space<vmem>>, vector<2x32xf32>,
      %c0_96 = arith.constant 0 : index
      %c0_97 = arith.constant 0 : index
      %151 = vector.load %arg11[%c0_96, %c0_97] : memref<2x2xf32, #tpu.memory_space<vmem>>, vector<2x2xf32>
      tpu.vector_store %arg11[%c0_96, %c0_97], %149 {strides = array<i32>} : memref<2x2xf32, #tpu.memory_space<vmem>>, vector<2x2xf32>,
    } else {
    }
    %c0_7 = arith.constant 0 : index
    %c0_8 = arith.constant 0 : index
    %11 = vector.load %arg10[%c0_7, %c0_8] : memref<2x32xf32, #tpu.memory_space<vmem>>, vector<2x32xf32>
    %cst = arith.constant 0.000000e+00 : f32
    %12 = vector.broadcast %cst : f32 to vector<2x32xf32>
    %13 = arith.maximumf %11, %12 : vector<2x32xf32>
    %c0_9 = arith.constant 0 : index
    %c0_10 = arith.constant 0 : index
    %14 = vector.load %arg11[%c0_9, %c0_10] : memref<2x2xf32, #tpu.memory_space<vmem>>, vector<2x2xf32>
    %c0_i32_11 = arith.constant 0 : i32
    %15 = arith.cmpi eq, %arg0, %c0_i32_11 : i32
    %cst_12 = arith.constant 0.000000e+00 : f32
    %16 = vector.broadcast %cst_12 : f32 to vector<2x2xf32>
    %17 = arith.select %15, %16, %14 : vector<2x2xf32>
    %18 = vector.extract_strided_slice %17 {offsets = [0, 0], sizes = [2, 1], strides = [1, 1]} : vector<2x2xf32> to vector<2x1xf32>
    %19 = vector.broadcast %18 : vector<2x1xf32> to vector<2x32xf32>
    %20 = arith.mulf %19, %4 : vector<2x32xf32>
    %21 = vector.extract_strided_slice %17 {offsets = [0, 1], sizes = [2, 1], strides = [1, 1]} : vector<2x2xf32> to vector<2x1xf32>
    %22 = vector.broadcast %21 : vector<2x1xf32> to vector<2x32xf32>
    %23 = arith.mulf %22, %7 : vector<2x32xf32>
    %24 = arith.addf %20, %23 : vector<2x32xf32>
    %cst_13 = arith.constant 0.899999976 : f32
    %25 = vector.broadcast %cst_13 : f32 to vector<2x32xf32>
    %26 = arith.mulf %25, %11 : vector<2x32xf32>
    %cst_14 = arith.constant dense<0.000000e+00> : vector<2x32xf32>
    %27 = tpu.matmul %13, %0, %cst_14 {dimension_numbers = #tpu.dot_dimension_numbers<[1], [0], [0], [1], [0, 0, 1, 1], [], []>} : vector<2x32xf32>, vector<32x32xf32>, vector<2x32xf32> -> vector<2x32xf32>
    %28 = arith.addf %26, %27 : vector<2x32xf32>
    %29 = arith.addf %28, %24 : vector<2x32xf32>
    %c0_15 = arith.constant 0 : index
    %c0_16 = arith.constant 0 : index
    %c0_17 = arith.constant 0 : index
    %30 = vector.load %arg3[%c0_15, %c0_16, %c0_17] : memref<4x2x32xf32, #tpu.memory_space<vmem>>, vector<1x2x32xf32>
    %31 = vector.shape_cast %30 : vector<1x2x32xf32> to vector<2x32xf32>
    %32 = arith.addf %29, %31 : vector<2x32xf32>
    %cst_18 = arith.constant 0.000000e+00 : f32
    %33 = vector.broadcast %cst_18 : f32 to vector<2x32xf32>
    %34 = arith.maximumf %32, %33 : vector<2x32xf32>
    %c0_19 = arith.constant 0 : index
    %c0_20 = arith.constant 0 : index
    %c0_21 = arith.constant 0 : index
    %35 = vector.load %arg4[%c0_19, %c0_20, %c0_21] : memref<4x2x2xf32, #tpu.memory_space<vmem>>, vector<1x2x2xf32>
    %36 = vector.shape_cast %35 : vector<1x2x2xf32> to vector<2x2xf32>
    %37 = arith.addf %14, %36 : vector<2x2xf32>
    %cst_22 = arith.constant dense<0.000000e+00> : vector<2x2xf32>
    %38 = tpu.matmul %34, %1, %cst_22 {dimension_numbers = #tpu.dot_dimension_numbers<[1], [0], [0], [1], [0, 0, 1, 1], [], []>} : vector<2x32xf32>, vector<32x2xf32>, vector<2x2xf32> -> vector<2x2xf32>
    %39 = arith.subf %37, %38 : vector<2x2xf32>
    %c0_23 = arith.constant 0 : index
    %c0_24 = arith.constant 0 : index
    %c0_25 = arith.constant 0 : index
    %40 = vector.load %arg8[%c0_23, %c0_24, %c0_25] : memref<4x2x32xf32, #tpu.memory_space<vmem>>, vector<1x2x32xf32>
    %41 = vector.shape_cast %40 : vector<1x2x32xf32> to vector<2x32xf32>
    %42 = vector.shape_cast %34 : vector<2x32xf32> to vector<1x2x32xf32>
    tpu.vector_store %arg8[%c0_23, %c0_24, %c0_25], %42 {strides = array<i32>} : memref<4x2x32xf32, #tpu.memory_space<vmem>>, vector<1x2x32xf32>,
    %c0_26 = arith.constant 0 : index
    %c0_27 = arith.constant 0 : index
    %c0_28 = arith.constant 0 : index
    %43 = vector.load %arg9[%c0_26, %c0_27, %c0_28] : memref<4x2x2xf32, #tpu.memory_space<vmem>>, vector<1x2x2xf32>
    %44 = vector.shape_cast %43 : vector<1x2x2xf32> to vector<2x2xf32>
    %45 = vector.shape_cast %39 : vector<2x2xf32> to vector<1x2x2xf32>
    tpu.vector_store %arg9[%c0_26, %c0_27, %c0_28], %45 {strides = array<i32>} : memref<4x2x2xf32, #tpu.memory_space<vmem>>, vector<1x2x2xf32>,
    %46 = vector.extract_strided_slice %39 {offsets = [0, 0], sizes = [2, 1], strides = [1, 1]} : vector<2x2xf32> to vector<2x1xf32>
    %47 = vector.broadcast %46 : vector<2x1xf32> to vector<2x32xf32>
    %48 = arith.mulf %47, %4 : vector<2x32xf32>
    %49 = vector.extract_strided_slice %39 {offsets = [0, 1], sizes = [2, 1], strides = [1, 1]} : vector<2x2xf32> to vector<2x1xf32>
    %50 = vector.broadcast %49 : vector<2x1xf32> to vector<2x32xf32>
    %51 = arith.mulf %50, %7 : vector<2x32xf32>
    %52 = arith.addf %48, %51 : vector<2x32xf32>
    %cst_29 = arith.constant 0.899999976 : f32
    %53 = vector.broadcast %cst_29 : f32 to vector<2x32xf32>
    %54 = arith.mulf %53, %32 : vector<2x32xf32>
    %cst_30 = arith.constant dense<0.000000e+00> : vector<2x32xf32>
    %55 = tpu.matmul %34, %0, %cst_30 {dimension_numbers = #tpu.dot_dimension_numbers<[1], [0], [0], [1], [0, 0, 1, 1], [], []>} : vector<2x32xf32>, vector<32x32xf32>, vector<2x32xf32> -> vector<2x32xf32>
    %56 = arith.addf %54, %55 : vector<2x32xf32>
    %57 = arith.addf %56, %52 : vector<2x32xf32>
    %c1_31 = arith.constant 1 : index
    %c0_32 = arith.constant 0 : index
    %c0_33 = arith.constant 0 : index
    %58 = vector.load %arg3[%c1_31, %c0_32, %c0_33] : memref<4x2x32xf32, #tpu.memory_space<vmem>>, vector<1x2x32xf32>
    %59 = vector.shape_cast %58 : vector<1x2x32xf32> to vector<2x32xf32>
    %60 = arith.addf %57, %59 : vector<2x32xf32>
    %cst_34 = arith.constant 0.000000e+00 : f32
    %61 = vector.broadcast %cst_34 : f32 to vector<2x32xf32>
    %62 = arith.maximumf %60, %61 : vector<2x32xf32>
    %c1_35 = arith.constant 1 : index
    %c0_36 = arith.constant 0 : index
    %c0_37 = arith.constant 0 : index
    %63 = vector.load %arg4[%c1_35, %c0_36, %c0_37] : memref<4x2x2xf32, #tpu.memory_space<vmem>>, vector<1x2x2xf32>
    %64 = vector.shape_cast %63 : vector<1x2x2xf32> to vector<2x2xf32>
    %65 = arith.addf %39, %64 : vector<2x2xf32>
    %cst_38 = arith.constant dense<0.000000e+00> : vector<2x2xf32>
    %66 = tpu.matmul %62, %1, %cst_38 {dimension_numbers = #tpu.dot_dimension_numbers<[1], [0], [0], [1], [0, 0, 1, 1], [], []>} : vector<2x32xf32>, vector<32x2xf32>, vector<2x2xf32> -> vector<2x2xf32>
    %67 = arith.subf %65, %66 : vector<2x2xf32>
    %c1_39 = arith.constant 1 : index
    %c0_40 = arith.constant 0 : index
    %c0_41 = arith.constant 0 : index
    %68 = vector.load %arg8[%c1_39, %c0_40, %c0_41] : memref<4x2x32xf32, #tpu.memory_space<vmem>>, vector<1x2x32xf32>
    %69 = vector.shape_cast %68 : vector<1x2x32xf32> to vector<2x32xf32>
    %70 = vector.shape_cast %62 : vector<2x32xf32> to vector<1x2x32xf32>
    tpu.vector_store %arg8[%c1_39, %c0_40, %c0_41], %70 {strides = array<i32>} : memref<4x2x32xf32, #tpu.memory_space<vmem>>, vector<1x2x32xf32>,
    %c1_42 = arith.constant 1 : index
    %c0_43 = arith.constant 0 : index
    %c0_44 = arith.constant 0 : index
    %71 = vector.load %arg9[%c1_42, %c0_43, %c0_44] : memref<4x2x2xf32, #tpu.memory_space<vmem>>, vector<1x2x2xf32>
    %72 = vector.shape_cast %71 : vector<1x2x2xf32> to vector<2x2xf32>
    %73 = vector.shape_cast %67 : vector<2x2xf32> to vector<1x2x2xf32>
    tpu.vector_store %arg9[%c1_42, %c0_43, %c0_44], %73 {strides = array<i32>} : memref<4x2x2xf32, #tpu.memory_space<vmem>>, vector<1x2x2xf32>,
    %74 = vector.extract_strided_slice %67 {offsets = [0, 0], sizes = [2, 1], strides = [1, 1]} : vector<2x2xf32> to vector<2x1xf32>
    %75 = vector.broadcast %74 : vector<2x1xf32> to vector<2x32xf32>
    %76 = arith.mulf %75, %4 : vector<2x32xf32>
    %77 = vector.extract_strided_slice %67 {offsets = [0, 1], sizes = [2, 1], strides = [1, 1]} : vector<2x2xf32> to vector<2x1xf32>
    %78 = vector.broadcast %77 : vector<2x1xf32> to vector<2x32xf32>
    %79 = arith.mulf %78, %7 : vector<2x32xf32>
    %80 = arith.addf %76, %79 : vector<2x32xf32>
    %cst_45 = arith.constant 0.899999976 : f32
    %81 = vector.broadcast %cst_45 : f32 to vector<2x32xf32>
    %82 = arith.mulf %81, %60 : vector<2x32xf32>
    %cst_46 = arith.constant dense<0.000000e+00> : vector<2x32xf32>
    %83 = tpu.matmul %62, %0, %cst_46 {dimension_numbers = #tpu.dot_dimension_numbers<[1], [0], [0], [1], [0, 0, 1, 1], [], []>} : vector<2x32xf32>, vector<32x32xf32>, vector<2x32xf32> -> vector<2x32xf32>
    %84 = arith.addf %82, %83 : vector<2x32xf32>
    %85 = arith.addf %84, %80 : vector<2x32xf32>
    %c2 = arith.constant 2 : index
    %c0_47 = arith.constant 0 : index
    %c0_48 = arith.constant 0 : index
    %86 = vector.load %arg3[%c2, %c0_47, %c0_48] : memref<4x2x32xf32, #tpu.memory_space<vmem>>, vector<1x2x32xf32>
    %87 = vector.shape_cast %86 : vector<1x2x32xf32> to vector<2x32xf32>
    %88 = arith.addf %85, %87 : vector<2x32xf32>
    %cst_49 = arith.constant 0.000000e+00 : f32
    %89 = vector.broadcast %cst_49 : f32 to vector<2x32xf32>
    %90 = arith.maximumf %88, %89 : vector<2x32xf32>
    %c2_50 = arith.constant 2 : index
    %c0_51 = arith.constant 0 : index
    %c0_52 = arith.constant 0 : index
    %91 = vector.load %arg4[%c2_50, %c0_51, %c0_52] : memref<4x2x2xf32, #tpu.memory_space<vmem>>, vector<1x2x2xf32>
    %92 = vector.shape_cast %91 : vector<1x2x2xf32> to vector<2x2xf32>
    %93 = arith.addf %67, %92 : vector<2x2xf32>
    %cst_53 = arith.constant dense<0.000000e+00> : vector<2x2xf32>
    %94 = tpu.matmul %90, %1, %cst_53 {dimension_numbers = #tpu.dot_dimension_numbers<[1], [0], [0], [1], [0, 0, 1, 1], [], []>} : vector<2x32xf32>, vector<32x2xf32>, vector<2x2xf32> -> vector<2x2xf32>
    %95 = arith.subf %93, %94 : vector<2x2xf32>
    %c2_54 = arith.constant 2 : index
    %c0_55 = arith.constant 0 : index
    %c0_56 = arith.constant 0 : index
    %96 = vector.load %arg8[%c2_54, %c0_55, %c0_56] : memref<4x2x32xf32, #tpu.memory_space<vmem>>, vector<1x2x32xf32>
    %97 = vector.shape_cast %96 : vector<1x2x32xf32> to vector<2x32xf32>
    %98 = vector.shape_cast %90 : vector<2x32xf32> to vector<1x2x32xf32>
    tpu.vector_store %arg8[%c2_54, %c0_55, %c0_56], %98 {strides = array<i32>} : memref<4x2x32xf32, #tpu.memory_space<vmem>>, vector<1x2x32xf32>,
    %c2_57 = arith.constant 2 : index
    %c0_58 = arith.constant 0 : index
    %c0_59 = arith.constant 0 : index
    %99 = vector.load %arg9[%c2_57, %c0_58, %c0_59] : memref<4x2x2xf32, #tpu.memory_space<vmem>>, vector<1x2x2xf32>
    %100 = vector.shape_cast %99 : vector<1x2x2xf32> to vector<2x2xf32>
    %101 = vector.shape_cast %95 : vector<2x2xf32> to vector<1x2x2xf32>
    tpu.vector_store %arg9[%c2_57, %c0_58, %c0_59], %101 {strides = array<i32>} : memref<4x2x2xf32, #tpu.memory_space<vmem>>, vector<1x2x2xf32>,
    %102 = vector.extract_strided_slice %95 {offsets = [0, 0], sizes = [2, 1], strides = [1, 1]} : vector<2x2xf32> to vector<2x1xf32>
    %103 = vector.broadcast %102 : vector<2x1xf32> to vector<2x32xf32>
    %104 = arith.mulf %103, %4 : vector<2x32xf32>
    %105 = vector.extract_strided_slice %95 {offsets = [0, 1], sizes = [2, 1], strides = [1, 1]} : vector<2x2xf32> to vector<2x1xf32>
    %106 = vector.broadcast %105 : vector<2x1xf32> to vector<2x32xf32>
    %107 = arith.mulf %106, %7 : vector<2x32xf32>
    %108 = arith.addf %104, %107 : vector<2x32xf32>
    %cst_60 = arith.constant 0.899999976 : f32
    %109 = vector.broadcast %cst_60 : f32 to vector<2x32xf32>
    %110 = arith.mulf %109, %88 : vector<2x32xf32>
    %cst_61 = arith.constant dense<0.000000e+00> : vector<2x32xf32>
    %111 = tpu.matmul %90, %0, %cst_61 {dimension_numbers = #tpu.dot_dimension_numbers<[1], [0], [0], [1], [0, 0, 1, 1], [], []>} : vector<2x32xf32>, vector<32x32xf32>, vector<2x32xf32> -> vector<2x32xf32>
    %112 = arith.addf %110, %111 : vector<2x32xf32>
    %113 = arith.addf %112, %108 : vector<2x32xf32>
    %c3 = arith.constant 3 : index
    %c0_62 = arith.constant 0 : index
    %c0_63 = arith.constant 0 : index
    %114 = vector.load %arg3[%c3, %c0_62, %c0_63] : memref<4x2x32xf32, #tpu.memory_space<vmem>>, vector<1x2x32xf32>
    %115 = vector.shape_cast %114 : vector<1x2x32xf32> to vector<2x32xf32>
    %116 = arith.addf %113, %115 : vector<2x32xf32>
    %cst_64 = arith.constant 0.000000e+00 : f32
    %117 = vector.broadcast %cst_64 : f32 to vector<2x32xf32>
    %118 = arith.maximumf %116, %117 : vector<2x32xf32>
    %c3_65 = arith.constant 3 : index
    %c0_66 = arith.constant 0 : index
    %c0_67 = arith.constant 0 : index
    %119 = vector.load %arg4[%c3_65, %c0_66, %c0_67] : memref<4x2x2xf32, #tpu.memory_space<vmem>>, vector<1x2x2xf32>
    %120 = vector.shape_cast %119 : vector<1x2x2xf32> to vector<2x2xf32>
    %121 = arith.addf %95, %120 : vector<2x2xf32>
    %cst_68 = arith.constant dense<0.000000e+00> : vector<2x2xf32>
    %122 = tpu.matmul %118, %1, %cst_68 {dimension_numbers = #tpu.dot_dimension_numbers<[1], [0], [0], [1], [0, 0, 1, 1], [], []>} : vector<2x32xf32>, vector<32x2xf32>, vector<2x2xf32> -> vector<2x2xf32>
    %123 = arith.subf %121, %122 : vector<2x2xf32>
    %c3_69 = arith.constant 3 : index
    %c0_70 = arith.constant 0 : index
    %c0_71 = arith.constant 0 : index
    %124 = vector.load %arg8[%c3_69, %c0_70, %c0_71] : memref<4x2x32xf32, #tpu.memory_space<vmem>>, vector<1x2x32xf32>
    %125 = vector.shape_cast %124 : vector<1x2x32xf32> to vector<2x32xf32>
    %126 = vector.shape_cast %118 : vector<2x32xf32> to vector<1x2x32xf32>
    tpu.vector_store %arg8[%c3_69, %c0_70, %c0_71], %126 {strides = array<i32>} : memref<4x2x32xf32, #tpu.memory_space<vmem>>, vector<1x2x32xf32>,
    %c3_72 = arith.constant 3 : index
    %c0_73 = arith.constant 0 : index
    %c0_74 = arith.constant 0 : index
    %127 = vector.load %arg9[%c3_72, %c0_73, %c0_74] : memref<4x2x2xf32, #tpu.memory_space<vmem>>, vector<1x2x2xf32>
    %128 = vector.shape_cast %127 : vector<1x2x2xf32> to vector<2x2xf32>
    %129 = vector.shape_cast %123 : vector<2x2xf32> to vector<1x2x2xf32>
    tpu.vector_store %arg9[%c3_72, %c0_73, %c0_74], %129 {strides = array<i32>} : memref<4x2x2xf32, #tpu.memory_space<vmem>>, vector<1x2x2xf32>,
    %c0_75 = arith.constant 0 : index
    %c0_76 = arith.constant 0 : index
    %130 = vector.load %arg10[%c0_75, %c0_76] : memref<2x32xf32, #tpu.memory_space<vmem>>, vector<2x32xf32>
    tpu.vector_store %arg10[%c0_75, %c0_76], %116 {strides = array<i32>} : memref<2x32xf32, #tpu.memory_space<vmem>>, vector<2x32xf32>,
    %c0_77 = arith.constant 0 : index
    %c0_78 = arith.constant 0 : index
    %131 = vector.load %arg11[%c0_77, %c0_78] : memref<2x2xf32, #tpu.memory_space<vmem>>, vector<2x2xf32>
    tpu.vector_store %arg11[%c0_77, %c0_78], %123 {strides = array<i32>} : memref<2x2xf32, #tpu.memory_space<vmem>>, vector<2x2xf32>,
    return
  }
  func.func @transform_0(%arg0: i32) -> (i32, i32) {
    %c0_i32 = arith.constant 0 : i32
    %c0_i32_0 = arith.constant 0 : i32
    %c0_i32_1 = arith.constant 0 : i32
    return %c0_i32, %c0_i32_0 : i32, i32
  }
  func.func @transform_1(%arg0: i32) -> (i32, i32) {
    %c0_i32 = arith.constant 0 : i32
    %c0_i32_0 = arith.constant 0 : i32
    %c0_i32_1 = arith.constant 0 : i32
    return %c0_i32, %c0_i32_0 : i32, i32
  }
  func.func @transform_2(%arg0: i32) -> (i32, i32, i32) {
    %c0_i32 = arith.constant 0 : i32
    %c0_i32_0 = arith.constant 0 : i32
    %c0_i32_1 = arith.constant 0 : i32
    return %arg0, %c0_i32, %c0_i32_0 : i32, i32, i32
  }
  func.func @transform_3(%arg0: i32) -> (i32, i32, i32) {
    %c0_i32 = arith.constant 0 : i32
    %c0_i32_0 = arith.constant 0 : i32
    %c0_i32_1 = arith.constant 0 : i32
    return %arg0, %c0_i32, %c0_i32_0 : i32, i32, i32
  }
  func.func @transform_4(%arg0: i32) -> (i32, i32) {
    %c0_i32 = arith.constant 0 : i32
    %c0_i32_0 = arith.constant 0 : i32
    %c0_i32_1 = arith.constant 0 : i32
    return %c0_i32, %c0_i32_0 : i32, i32
  }
  func.func @transform_5(%arg0: i32) -> (i32, i32) {
    %c0_i32 = arith.constant 0 : i32
    %c0_i32_0 = arith.constant 0 : i32
    %c0_i32_1 = arith.constant 0 : i32
    return %c0_i32, %c0_i32_0 : i32, i32
  }
  func.func @transform_6(%arg0: i32) -> (i32, i32) {
    %c0_i32 = arith.constant 0 : i32
    %c0_i32_0 = arith.constant 0 : i32
    %c0_i32_1 = arith.constant 0 : i32
    return %c0_i32, %c0_i32_0 : i32, i32
  }
  func.func @transform_7(%arg0: i32) -> (i32, i32, i32) {
    %c0_i32 = arith.constant 0 : i32
    %c0_i32_0 = arith.constant 0 : i32
    %c0_i32_1 = arith.constant 0 : i32
    return %arg0, %c0_i32, %c0_i32_0 : i32, i32, i32
  }
  func.func @transform_8(%arg0: i32) -> (i32, i32, i32) {
    %c0_i32 = arith.constant 0 : i32
    %c0_i32_0 = arith.constant 0 : i32
    %c0_i32_1 = arith.constant 0 : i32
    return %arg0, %c0_i32, %c0_i32_0 : i32, i32, i32
  }
}

</mosaic_0001>

<llo_original>
// kernel: tpu_custom_call.1
$region0: #{tpu_custom_call.1}
  #allocation0 [shape = 'u32[]', space=smem, size = 0x4, offset = 0x4, fixed_abs, tag = 'smem constant byte address 0x4 - core index']
  #allocation1 [shape = 'u32[144,128]{1,0:T(1,128)}', space=vmem, size = 0x12000, scoped, tag = 'internal scratch']
  #allocation2 [shape = 'f32[2,32]{1,0:T(2,128)}', space=vmem, size = 0x400, scoped, tag = 'scratch operand']
  #allocation3 [shape = 'f32[2,2]{1,0:T(2,128)}', space=vmem, size = 0x400, scoped, tag = 'scratch operand']
  %s0 = inlined_call_operand.vmem [shape: f32[2,32], index: 0, kind: input, shape index: {}]
  %s1 = inlined_call_operand.vmem [shape: f32[2,2], index: 1, kind: input, shape index: {}]
  %s2 = inlined_call_operand.vmem [shape: f32[8,2,32], index: 2, kind: input, shape index: {}]
  %s3 = inlined_call_operand.vmem [shape: f32[8,2,2], index: 3, kind: input, shape index: {}]
  %s4 = inlined_call_operand.vmem [shape: f32[32,32], index: 4, kind: input, shape index: {}]
  %s5 = inlined_call_operand.vmem [shape: f32[2,32], index: 5, kind: input, shape index: {}]
  %s6 = inlined_call_operand.vmem [shape: f32[32,2], index: 6, kind: input, shape index: {}]
  %s7 = inlined_call_operand.hbm [shape: f32[8,2,32], index: 7, kind: output, shape index: {0}]
  %s8 = inlined_call_operand.vmem [shape: f32[8,2,2], index: 8, kind: output, shape index: {1}]
  %9 = xla_tuple %s7, %s8
  %s10 = sld [smem:[#allocation0]]
  $region73: #{tpu_custom_call.1} parent=0
    _
  %s12 = ssub.s32 1, %s10
  %s13 = scalar_select 0, %s12, %s10
  $region1: #{tpu_custom_call.1} parent=0
    #allocation4 [shape = 'u8[8192]{0}', space=vmem, size = 0x2000, scoped, tag = 'output window, operand 0']
    #allocation5 [shape = 's32[2]{0}', space=sflag, size = 0x8, scoped, tag = 'scoped memory for tpu_custom_call.1']
    %14 = vsyncpa [#allocation5], 0
    %s15 = scalar_lea.sflag [#allocation5], 1
    %16 = vsyncpa %s15, 0
    loop: start=0, step=1, limit=4
    $region2: #{tpu_custom_call.1} parent=1 // loop_pre_header
      _
    $region3: #{tpu_custom_call.1} parent=1 // loop_header
      %s18 = sphi 0, %s22
      %p19 = scmp.ge.s32.totalorder %s18, 4
      %s26 = sphi 0, %s26
      %s28 = sphi 0, %s26
      %s29 = sphi 0, %s28
      %s43 = sphi 0, %s29
      %s47 = sphi 0, %s47
      %s49 = sphi 0, %s47
      %s50 = sphi 0, %s49
      %s64 = sphi 0, %s50
      %s70 = sphi 0, %s72
      %s73 = sphi 0, %s70
      %s74 = sphi 0, %s73
      %s90 = sphi 0, %s74
      %s96 = sphi 0, %s98
      %s99 = sphi 0, %s96
      %s100 = sphi 0, %s99
      %s116 = sphi 0, %s100
      %s120 = sphi 0, %s120
      %s122 = sphi 0, %s120
      %s123 = sphi 0, %s122
      %s137 = sphi 0, %s123
      %s141 = sphi 0, %s141
      %s143 = sphi 0, %s141
      %s144 = sphi 0, %s143
      %s158 = sphi 0, %s144
      %s162 = sphi 0, %s162
      %s164 = sphi 0, %s162
      %s165 = sphi 0, %s164
      %s179 = sphi 0, %s165
      %s185 = sphi 0, %s187
      %s188 = sphi 0, %s185
      %s189 = sphi 0, %s188
      %s205 = sphi 0, %s189
      %s211 = sphi 0, %s213
      %s214 = sphi 0, %s211
      %s215 = sphi 0, %s214
      %s231 = sphi 0, %s215
    $region4: #{tpu_custom_call.1} parent=1 // loop_header_branch
      %21 = sbr.rel (%p19) target = $region8
    $region5: #{tpu_custom_call.1} parent=1 // loop_body
      %s23 = ssub.s32 %s18, 1
      %s24 = ssub.s32 %s18, 2
      %s25 = sadd.s32 %s18, 1
      %s27 = sadd.s32 %s26, 1
      %p30 = scmp.eq.s32.totalorder %s18, 1
      %p31 = scmp.ne.s32.totalorder %s26, %s28
      %p32 = scmp.eq.s32.totalorder %s18, 0
      %p33 = por %p31, %p32
      %p34 = scmp.ne.s32.totalorder %s26, %s28
      %p35 = scmp.eq.s32.totalorder %s23, 1
      %p36 = por %p34, %p35
      %p37 = scmp.ne.s32.totalorder %s28, %s29
      %p38 = scmp.eq.s32.totalorder %s23, 0
      %p39 = por %p37, %p38
      %p40 = scmp.ne.s32.totalorder %s28, %s29
      %p41 = scmp.eq.s32.totalorder %s24, 1
      %p42 = por %p40, %p41
      %p44 = scmp.ne.s32.totalorder %s29, %s43
      %p45 = scmp.eq.s32.totalorder %s24, 0
      %p46 = por %p44, %p45
      %s48 = sadd.s32 %s47, 1
      %p51 = scmp.eq.s32.totalorder %s18, 1
      %p52 = scmp.ne.s32.totalorder %s47, %s49
      %p53 = scmp.eq.s32.totalorder %s18, 0
      %p54 = por %p52, %p53
      %p55 = scmp.ne.s32.totalorder %s47, %s49
      %p56 = scmp.eq.s32.totalorder %s23, 1
      %p57 = por %p55, %p56
      %p58 = scmp.ne.s32.totalorder %s49, %s50
      %p59 = scmp.eq.s32.totalorder %s23, 0
      %p60 = por %p58, %p59
      %p61 = scmp.ne.s32.totalorder %s49, %s50
      %p62 = scmp.eq.s32.totalorder %s24, 1
      %p63 = por %p61, %p62
      %p65 = scmp.ne.s32.totalorder %s50, %s64
      %p66 = scmp.eq.s32.totalorder %s24, 0
      %p67 = por %p65, %p66
      %s68 = ssub.s32 %s18, %s25
      %p69 = scmp.eq.s32.totalorder %s68, 0
      %s71 = sadd.s32 %s70, 1
      %s72 = scalar_select %p69, %s70, %s71
      %p75 = pneg %p69
      %p76 = scmp.eq.s32.totalorder %s18, 1
      %p77 = por %p75, %p76
      %p78 = scmp.ne.s32.totalorder %s70, %s73
      %p79 = scmp.eq.s32.totalorder %s18, 0
      %p80 = por %p78, %p79
      %p81 = scmp.ne.s32.totalorder %s70, %s73
      %p82 = scmp.eq.s32.totalorder %s23, 1
      %p83 = por %p81, %p82
      %p84 = scmp.ne.s32.totalorder %s73, %s74
      %p85 = scmp.eq.s32.totalorder %s23, 0
      %p86 = por %p84, %p85
      %p87 = scmp.ne.s32.totalorder %s73, %s74
      %p88 = scmp.eq.s32.totalorder %s24, 1
      %p89 = por %p87, %p88
      %p91 = scmp.ne.s32.totalorder %s74, %s90
      %p92 = scmp.eq.s32.totalorder %s24, 0
      %p93 = por %p91, %p92
      %s94 = ssub.s32 %s18, %s25
      %p95 = scmp.eq.s32.totalorder %s94, 0
      %s97 = sadd.s32 %s96, 1
      %s98 = scalar_select %p95, %s96, %s97
      %p101 = pneg %p95
      %p102 = scmp.eq.s32.totalorder %s18, 1
      %p103 = por %p101, %p102
      %p104 = scmp.ne.s32.totalorder %s96, %s99
      %p105 = scmp.eq.s32.totalorder %s18, 0
      %p106 = por %p104, %p105
      %p107 = scmp.ne.s32.totalorder %s96, %s99
      %p108 = scmp.eq.s32.totalorder %s23, 1
      %p109 = por %p107, %p108
      %p110 = scmp.ne.s32.totalorder %s99, %s100
      %p111 = scmp.eq.s32.totalorder %s23, 0
      %p112 = por %p110, %p111
      %p113 = scmp.ne.s32.totalorder %s99, %s100
      %p114 = scmp.eq.s32.totalorder %s24, 1
      %p115 = por %p113, %p114
      %p117 = scmp.ne.s32.totalorder %s100, %s116
      %p118 = scmp.eq.s32.totalorder %s24, 0
      %p119 = por %p117, %p118
      %s121 = sadd.s32 %s120, 1
      %p124 = scmp.eq.s32.totalorder %s18, 1
      %p125 = scmp.ne.s32.totalorder %s120, %s122
      %p126 = scmp.eq.s32.totalorder %s18, 0
      %p127 = por %p125, %p126
      %p128 = scmp.ne.s32.totalorder %s120, %s122
      %p129 = scmp.eq.s32.totalorder %s23, 1
      %p130 = por %p128, %p129
      %p131 = scmp.ne.s32.totalorder %s122, %s123
      %p132 = scmp.eq.s32.totalorder %s23, 0
      %p133 = por %p131, %p132
      %p134 = scmp.ne.s32.totalorder %s122, %s123
      %p135 = scmp.eq.s32.totalorder %s24, 1
      %p136 = por %p134, %p135
      %p138 = scmp.ne.s32.totalorder %s123, %s137
      %p139 = scmp.eq.s32.totalorder %s24, 0
      %p140 = por %p138, %p139
      %s142 = sadd.s32 %s141, 1
      %p145 = scmp.eq.s32.totalorder %s18, 1
      %p146 = scmp.ne.s32.totalorder %s141, %s143
      %p147 = scmp.eq.s32.totalorder %s18, 0
      %p148 = por %p146, %p147
      %p149 = scmp.ne.s32.totalorder %s141, %s143
      %p150 = scmp.eq.s32.totalorder %s23, 1
      %p151 = por %p149, %p150
      %p152 = scmp.ne.s32.totalorder %s143, %s144
      %p153 = scmp.eq.s32.totalorder %s23, 0
      %p154 = por %p152, %p153
      %p155 = scmp.ne.s32.totalorder %s143, %s144
      %p156 = scmp.eq.s32.totalorder %s24, 1
      %p157 = por %p155, %p156
      %p159 = scmp.ne.s32.totalorder %s144, %s158
      %p160 = scmp.eq.s32.totalorder %s24, 0
      %p161 = por %p159, %p160
      %s163 = sadd.s32 %s162, 1
      %p166 = scmp.eq.s32.totalorder %s18, 1
      %p167 = scmp.ne.s32.totalorder %s162, %s164
      %p168 = scmp.eq.s32.totalorder %s18, 0
      %p169 = por %p167, %p168
      %p170 = scmp.ne.s32.totalorder %s162, %s164
      %p171 = scmp.eq.s32.totalorder %s23, 1
      %p172 = por %p170, %p171
      %p173 = scmp.ne.s32.totalorder %s164, %s165
      %p174 = scmp.eq.s32.totalorder %s23, 0
      %p175 = por %p173, %p174
      %p176 = scmp.ne.s32.totalorder %s164, %s165
      %p177 = scmp.eq.s32.totalorder %s24, 1
      %p178 = por %p176, %p177
      %p180 = scmp.ne.s32.totalorder %s165, %s179
      %p181 = scmp.eq.s32.totalorder %s24, 0
      %p182 = por %p180, %p181
      %s183 = ssub.s32 %s18, %s25
      %p184 = scmp.eq.s32.totalorder %s183, 0
      %s186 = sadd.s32 %s185, 1
      %s187 = scalar_select %p184, %s185, %s186
      %p190 = pneg %p184
      %p191 = scmp.eq.s32.totalorder %s18, 1
      %p192 = por %p190, %p191
      %p193 = scmp.ne.s32.totalorder %s185, %s188
      %p194 = scmp.eq.s32.totalorder %s18, 0
      %p195 = por %p193, %p194
      %p196 = scmp.ne.s32.totalorder %s185, %s188
      %p197 = scmp.eq.s32.totalorder %s23, 1
      %p198 = por %p196, %p197
      %p199 = scmp.ne.s32.totalorder %s188, %s189
      %p200 = scmp.eq.s32.totalorder %s23, 0
      %p201 = por %p199, %p200
      %p202 = scmp.ne.s32.totalorder %s188, %s189
      %p203 = scmp.eq.s32.totalorder %s24, 1
      %p204 = por %p202, %p203
      %p206 = scmp.ne.s32.totalorder %s189, %s205
      %p207 = scmp.eq.s32.totalorder %s24, 0
      %p208 = por %p206, %p207
      %s209 = ssub.s32 %s18, %s25
      %p210 = scmp.eq.s32.totalorder %s209, 0
      %s212 = sadd.s32 %s211, 1
      %s213 = scalar_select %p210, %s211, %s212
      %p216 = pneg %p210
      %p217 = scmp.eq.s32.totalorder %s18, 1
      %p218 = por %p216, %p217
      %p219 = scmp.ne.s32.totalorder %s211, %s214
      %p220 = scmp.eq.s32.totalorder %s18, 0
      %p221 = por %p219, %p220
      %p222 = scmp.ne.s32.totalorder %s211, %s214
      %p223 = scmp.eq.s32.totalorder %s23, 1
      %p224 = por %p222, %p223
      %p225 = scmp.ne.s32.totalorder %s214, %s215
      %p226 = scmp.eq.s32.totalorder %s23, 0
      %p227 = por %p225, %p226
      %p228 = scmp.ne.s32.totalorder %s214, %s215
      %p229 = scmp.eq.s32.totalorder %s24, 1
      %p230 = por %p228, %p229
      %p232 = scmp.ne.s32.totalorder %s215, %s231
      %p233 = scmp.eq.s32.totalorder %s24, 0
      %p234 = por %p232, %p233
      %p235 = scmp.le.s32.totalorder 1, %s18
      %p236 = scmp.lt.s32.totalorder %s18, 3
      %p237 = pnand %p235, %p236
      %p238 = pneg %p237
      // Predicated region
      $region9: #{tpu_custom_call.1} parent=5 // pred_check
        _
      $region10: #{tpu_custom_call.1} parent=5 // pred_check_branch
        %240 = sbr.rel (%p237) target = $region12
      $region11: #{tpu_custom_call.1} parent=5 // pred_region
        %s241 = ssub.s32 %s18, 1
        // Predicated region
        $region13: #{tpu_custom_call.1} parent=11 // pred_check
          %p242 = pneg %p39
        $region14: #{tpu_custom_call.1} parent=11 // pred_check_branch
          %244 = sbr.rel (%p242) target = $region16
        $region15: #{tpu_custom_call.1} parent=11 // pred_region
          _
        $region16: #{tpu_custom_call.1} parent=11 // pred_fallthru
          _
        // Predicated region
        $region17: #{tpu_custom_call.1} parent=11 // pred_check
          %p245 = pneg %p60
        $region18: #{tpu_custom_call.1} parent=11 // pred_check_branch
          %247 = sbr.rel (%p245) target = $region20
        $region19: #{tpu_custom_call.1} parent=11 // pred_region
          _
        $region20: #{tpu_custom_call.1} parent=11 // pred_fallthru
          _
        // Predicated region
        $region21: #{tpu_custom_call.1} parent=11 // pred_check
          %p248 = pneg %p133
        $region22: #{tpu_custom_call.1} parent=11 // pred_check_branch
          %250 = sbr.rel (%p248) target = $region24
        $region23: #{tpu_custom_call.1} parent=11 // pred_region
          _
        $region24: #{tpu_custom_call.1} parent=11 // pred_fallthru
          _
        // Predicated region
        $region25: #{tpu_custom_call.1} parent=11 // pred_check
          %p251 = pneg %p154
        $region26: #{tpu_custom_call.1} parent=11 // pred_check_branch
          %253 = sbr.rel (%p251) target = $region28
        $region27: #{tpu_custom_call.1} parent=11 // pred_region
          _
        $region28: #{tpu_custom_call.1} parent=11 // pred_fallthru
          _
        // Predicated region
        $region29: #{tpu_custom_call.1} parent=11 // pred_check
          %p254 = pneg %p175
        $region30: #{tpu_custom_call.1} parent=11 // pred_check_branch
          %256 = sbr.rel (%p254) target = $region32
        $region31: #{tpu_custom_call.1} parent=11 // pred_region
          _
        $region32: #{tpu_custom_call.1} parent=11 // pred_fallthru
          _
      $region12: #{tpu_custom_call.1} parent=5 // pred_fallthru
        _
      %p257 = scmp.lt.s32.totalorder %s18, 2
      // Predicated region
      $region33: #{tpu_custom_call.1} parent=5 // pred_check
        %p258 = pneg %p257
      $region34: #{tpu_custom_call.1} parent=5 // pred_check_branch
        %260 = sbr.rel (%p258) target = $region36
      $region35: #{tpu_custom_call.1} parent=5 // pred_region
        // Predicated region
        $region37: #{tpu_custom_call.1} parent=35 // pred_check
          %p261 = pneg %p80
        $region38: #{tpu_custom_call.1} parent=35 // pred_check_branch
          %263 = sbr.rel (%p261) target = $region40
        $region39: #{tpu_custom_call.1} parent=35 // pred_region
          %s264 = smul.u32 4, %s18
          %p265 = scmp.lt.s32.totalorder %s264, 7
          %s266 = scalar_select %p265, %s264, 7
          %s267 = smul.addr %s266, 2
          %s268 = scalar_lea.vmem %s2, %s267
          %s269 = smul.u32 4, %s18
        $region40: #{tpu_custom_call.1} parent=35 // pred_fallthru
          _
        // Predicated region
        $region41: #{tpu_custom_call.1} parent=35 // pred_check
          %p270 = pneg %p106
        $region42: #{tpu_custom_call.1} parent=35 // pred_check_branch
          %272 = sbr.rel (%p270) target = $region44
        $region43: #{tpu_custom_call.1} parent=35 // pred_region
          %s273 = smul.u32 4, %s18
          %p274 = scmp.lt.s32.totalorder %s273, 7
          %s275 = scalar_select %p274, %s273, 7
          %s276 = smul.addr %s275, 2
          %s277 = scalar_lea.vmem %s3, %s276
          %s278 = smul.u32 4, %s18
        $region44: #{tpu_custom_call.1} parent=35 // pred_fallthru
          _
      $region36: #{tpu_custom_call.1} parent=5 // pred_fallthru
        _
      %p279 = scmp.le.s32.totalorder 1, %s18
      %p280 = scmp.lt.s32.totalorder %s18, 3
      %p281 = pnand %p279, %p280
      %p282 = pneg %p281
      // Predicated region
      $region45: #{tpu_custom_call.1} parent=5 // pred_check
        _
      $region46: #{tpu_custom_call.1} parent=5 // pred_check_branch
        %284 = sbr.rel (%p281) target = $region48
      $region47: #{tpu_custom_call.1} parent=5 // pred_region
        %s285 = ssub.s32 %s18, 1
        %p286 = pneg %p39
        %p287 = pneg %p36
        %p288 = pneg %p60
        %p289 = pneg %p57
        %s290 = smul.u32 4, %s23
        %p291 = scmp.lt.s32.totalorder %s290, 7
        %s292 = scalar_select %p291, %s290, 7
        %s293 = smul.addr %s292, 2
        %s294 = scalar_lea.vmem %s2, %s293
        %p295 = pneg %p86
        %p296 = pneg %p83
        %s297 = smul.u32 4, %s23
        %p298 = scmp.lt.s32.totalorder %s297, 7
        %s299 = scalar_select %p298, %s297, 7
        %s300 = smul.addr %s299, 2
        %s301 = scalar_lea.vmem %s3, %s300
        %p302 = pneg %p112
        %p303 = pneg %p109
        %p304 = pneg %p133
        %p305 = pneg %p130
        %p306 = pneg %p154
        %p307 = pneg %p151
        %p308 = pneg %p175
        %p309 = pneg %p172
        %p310 = pneg %p201
        %p311 = pneg %p198
        %s312 = sand.u32 %s188, 1
        %s313 = scalar_lea.sflag [#allocation5], %s312
        %s314 = sand.u32 %s188, 1
        %s315 = smul.addr %s314, 8
        %s316 = scalar_lea.vmem [#allocation4], %s315
        %p317 = pneg %p227
        %p318 = pneg %p224
        %s319 = smul.u32 4, %s23
        %p320 = scmp.lt.s32.totalorder %s319, 7
        %s321 = scalar_select %p320, %s319, 7
        %s322 = smul.addr %s321, 2
        %s323 = scalar_lea.vmem %s8, %s322
        %s324 = smul.u32 4, %s23
        %p325 = scmp.lt.s32.totalorder %s324, 7
        %s326 = scalar_select %p325, %s324, 7
        %s327 = smul.addr %s326, 2
        %s328 = scalar_lea.vmem %s2, %s327
        %s329 = smul.u32 4, %s23
        %s330 = smul.u32 4, %s23
        %p331 = scmp.lt.s32.totalorder %s330, 7
        %s332 = scalar_select %p331, %s330, 7
        %s333 = smul.addr %s332, 2
        %s334 = scalar_lea.vmem %s3, %s333
        %s335 = smul.u32 4, %s23
        %s336 = smul.u32 4, %s23
        %s337 = smul.u32 4, %s23
        %p338 = scmp.lt.s32.totalorder %s337, 7
        %s339 = scalar_select %p338, %s337, 7
        %s340 = smul.addr %s339, 2
        %s341 = scalar_lea.vmem %s8, %s340
        %s342 = smul.u32 4, %s23
        %v343 = vld [vmem:[%s4] sm:$0xff]
        %v344 = vld [vmem:[%s4 + $0x8] sm:$0xff]
        %v345 = vld [vmem:[%s4 + $0x10] sm:$0xff]
        %v346 = vld [vmem:[%s4 + $0x18] sm:$0xff]
        %v347 = vld [vmem:[%s6] sm:$0xff]
        %v348 = vld [vmem:[%s6 + $0x8] sm:$0xff]
        %v349 = vld [vmem:[%s6 + $0x10] sm:$0xff]
        %v350 = vld [vmem:[%s6 + $0x18] sm:$0xff]
        %v351 = vld [vmem:[%s5] sm:$0x1]
        %v352 = vlaneseq
        %v353 = vshrl.u32 %v352, 7
        %v354 = vsub.s32 0, %v353
        %v355 = vrot.slane %v351, %v354
        %v356 = vld [vmem:[%s5 + $0x1] sm:$0x1]
        %v357 = vlaneseq
        %v358 = vshrl.u32 %v357, 7
        %v359 = vsub.s32 0, %v358
        %v360 = vrot.slane %v356, %v359
        %p361 = scmp.eq.s32.totalorder %s23, 0
        // Predicated region
        $region49: #{tpu_custom_call.1} parent=47 // pred_check
          %p362 = pneg %p361
        $region50: #{tpu_custom_call.1} parent=47 // pred_check_branch
          %364 = sbr.rel (%p362) target = $region52
        $region51: #{tpu_custom_call.1} parent=47 // pred_region
          %v365 = vld [vmem:[%s0] sm:$0x3]
          %v366 = vmax.f32 %v365, 0.0
          %v367 = vmul.f32 %v365, 0.9
          %vm368 = vcmask 261120
          %v370 = vsel %vm368, %v366, 0
          %372 = vmatprep.subr.mxu0 0.0
          %373 = vmatpush1.msra.mxu0 0.0
          %374 = vmatprep.subr.mxu0 0.0
          %375 = vmatpush1.msra.mxu0 0.0
          %376 = vmatprep.subr.mxu0 0.0
          %377 = vmatpush1.msra.mxu0 0.0
          %378 = vmatprep.subr.mxu0 0.0
          %379 = vmatpush1.msra.mxu0 0.0
          %380 = vmatprep.subr.mxu0 0.0
          %381 = vmatpush1.msra.mxu0 0.0
          %382 = vmatprep.subr.mxu0 0.0
          %383 = vmatpush1.msra.mxu0 0.0
          %384 = vmatprep.subr.mxu0 0.0
          %385 = vmatpush1.msra.mxu0 0.0
          %386 = vmatprep.subr.mxu0 0.0
          %387 = vmatpush1.msra.mxu0 0.0
          %388 = vmatprep.subr.mxu0 0.0
          %389 = vmatpush1.msra.mxu0 0.0
          %390 = vmatprep.subr.mxu0 0.0
          %391 = vmatpush1.msra.mxu0 0.0
          %392 = vmatprep.subr.mxu0 0.0
          %393 = vmatpush1.msra.mxu0 0.0
          %394 = vmatprep.subr.mxu0 0.0
          %395 = vmatpush1.msra.mxu0 0.0
          %396 = vmatprep.subr.mxu0 0.0
          %397 = vmatpush1.msra.mxu0 %v346
          %398 = vmatprep.subr.mxu0 0.0
          %399 = vmatpush1.msra.mxu0 %v345
          %400 = vmatprep.subr.mxu0 0.0
          %401 = vmatpush1.msra.mxu0 %v344
          %402 = vmatprep.subr.mxu0 0.0
          %403 = vmatpush1.msra.mxu0 %v343
          %404 = vmatprep.subr.mxu0 0.0
          %405 = vmatpush2.msra.mxu0 0.0
          %406 = vmatprep.subr.mxu0 0.0
          %407 = vmatpush2.msra.mxu0 0.0
          %408 = vmatprep.subr.mxu0 0.0
          %409 = vmatpush2.msra.mxu0 0.0
          %410 = vmatprep.subr.mxu0 0.0
          %411 = vmatpush2.msra.mxu0 0.0
          %412 = vmatprep.subr.mxu0 0.0
          %413 = vmatpush2.msra.mxu0 0.0
          %414 = vmatprep.subr.mxu0 0.0
          %415 = vmatpush2.msra.mxu0 0.0
          %416 = vmatprep.subr.mxu0 0.0
          %417 = vmatpush2.msra.mxu0 0.0
          %418 = vmatprep.subr.mxu0 0.0
          %419 = vmatpush2.msra.mxu0 0.0
          %420 = vmatprep.subr.mxu0 0.0
          %421 = vmatpush2.msra.mxu0 0.0
          %422 = vmatprep.subr.mxu0 0.0
          %423 = vmatpush2.msra.mxu0 0.0
          %424 = vmatprep.subr.mxu0 0.0
          %425 = vmatpush2.msra.mxu0 0.0
          %426 = vmatprep.subr.mxu0 0.0
          %427 = vmatpush2.msra.mxu0 0.0
          %428 = vmatprep.subr.mxu0 0.0
          %429 = vmatpush2.msra.mxu0 0.0
          %430 = vmatprep.subr.mxu0 0.0
          %431 = vmatpush2.msra.mxu0 0.0
          %432 = vmatprep.subr.mxu0 0.0
          %433 = vmatpush2.msra.mxu0 0.0
          %434 = vmatprep.subr.mxu0 0.0
          %435 = vmatpush2.msra.mxu0 0.0
          %436 = vmatprep.mubr.f32.mxu0 0.0
          %437 = vmatmul.mubr.f32.gmra.mxu0 %v370
          %v438 = vpop.f32.mrf.mxu0
          %v439 = vadd.f32 0.0, %v438
          %v440 = vpop.f32.mrf.mxu0
          %441 = vdwg.mxu0
          %v442 = vadd.f32 %v367, %v439
          %v443 = vld [vmem:[%s328] sm:$0x3]
          %v444 = vadd.f32 %v442, %v443
          %v445 = vmax.f32 %v444, 0.0
          %v446 = vld [vmem:[%s1] sm:$0x3]
          %v447 = vld [vmem:[%s334] sm:$0x3]
          %v448 = vadd.f32 %v446, %v447
          %v450 = vsel %vm368, %v445, 0
          %452 = vmatprep.subr.mxu0 0.0
          %453 = vmatpush1.msra.mxu0 0.0
          %454 = vmatprep.subr.mxu0 0.0
          %455 = vmatpush1.msra.mxu0 0.0
          %456 = vmatprep.subr.mxu0 0.0
          %457 = vmatpush1.msra.mxu0 0.0
          %458 = vmatprep.subr.mxu0 0.0
          %459 = vmatpush1.msra.mxu0 0.0
          %460 = vmatprep.subr.mxu0 0.0
          %461 = vmatpush1.msra.mxu0 0.0
          %462 = vmatprep.subr.mxu0 0.0
          %463 = vmatpush1.msra.mxu0 0.0
          %464 = vmatprep.subr.mxu0 0.0
          %465 = vmatpush1.msra.mxu0 0.0
          %466 = vmatprep.subr.mxu0 0.0
          %467 = vmatpush1.msra.mxu0 0.0
          %468 = vmatprep.subr.mxu0 0.0
          %469 = vmatpush1.msra.mxu0 0.0
          %470 = vmatprep.subr.mxu0 0.0
          %471 = vmatpush1.msra.mxu0 0.0
          %472 = vmatprep.subr.mxu0 0.0
          %473 = vmatpush1.msra.mxu0 0.0
          %474 = vmatprep.subr.mxu0 0.0
          %475 = vmatpush1.msra.mxu0 0.0
          %476 = vmatprep.subr.mxu0 0.0
          %477 = vmatpush1.msra.mxu0 %v350
          %478 = vmatprep.subr.mxu0 0.0
          %479 = vmatpush1.msra.mxu0 %v349
          %480 = vmatprep.subr.mxu0 0.0
          %481 = vmatpush1.msra.mxu0 %v348
          %482 = vmatprep.subr.mxu0 0.0
          %483 = vmatpush1.msra.mxu0 %v347
          %484 = vmatprep.subr.mxu0 0.0
          %485 = vmatpush2.msra.mxu0 0.0
          %486 = vmatprep.subr.mxu0 0.0
          %487 = vmatpush2.msra.mxu0 0.0
          %488 = vmatprep.subr.mxu0 0.0
          %489 = vmatpush2.msra.mxu0 0.0
          %490 = vmatprep.subr.mxu0 0.0
          %491 = vmatpush2.msra.mxu0 0.0
          %492 = vmatprep.subr.mxu0 0.0
          %493 = vmatpush2.msra.mxu0 0.0
          %494 = vmatprep.subr.mxu0 0.0
          %495 = vmatpush2.msra.mxu0 0.0
          %496 = vmatprep.subr.mxu0 0.0
          %497 = vmatpush2.msra.mxu0 0.0
          %498 = vmatprep.subr.mxu0 0.0
          %499 = vmatpush2.msra.mxu0 0.0
          %500 = vmatprep.subr.mxu0 0.0
          %501 = vmatpush2.msra.mxu0 0.0
          %502 = vmatprep.subr.mxu0 0.0
          %503 = vmatpush2.msra.mxu0 0.0
          %504 = vmatprep.subr.mxu0 0.0
          %505 = vmatpush2.msra.mxu0 0.0
          %506 = vmatprep.subr.mxu0 0.0
          %507 = vmatpush2.msra.mxu0 0.0
          %508 = vmatprep.subr.mxu0 0.0
          %509 = vmatpush2.msra.mxu0 0.0
          %510 = vmatprep.subr.mxu0 0.0
          %511 = vmatpush2.msra.mxu0 0.0
          %512 = vmatprep.subr.mxu0 0.0
          %513 = vmatpush2.msra.mxu0 0.0
          %514 = vmatprep.subr.mxu0 0.0
          %515 = vmatpush2.msra.mxu0 0.0
          %516 = vmatprep.mubr.f32.mxu0 0.0
          %517 = vmatmul.mubr.f32.gmra.mxu0 %v450
          %v518 = vpop.f32.mrf.mxu0
          %v519 = vadd.f32 0.0, %v518
          %v520 = vpop.f32.mrf.mxu0
          %521 = vdwg.mxu0
          %v522 = vsub.f32 %v448, %v519
          %vm523 = vcmask 254976
          %524 = vst.msk [vmem:[#allocation2] sm:$0x3] %vm523, %v444
          %vm525 = vcmask 9216
          %526 = vst.msk [vmem:[#allocation3] sm:$0x3] %vm525, %v522
        $region52: #{tpu_custom_call.1} parent=47 // pred_fallthru
          _
        %v527 = vld [vmem:[#allocation2] sm:$0x3]
        %v528 = vmax.f32 %v527, 0.0
        %v529 = vld [vmem:[#allocation3] sm:$0x3]
        %s530 = scalar_select %p361, 1, 0
        %v531 = vstv %s530
        %vm532 = vcmp.eq.s32.totalorder %v531, 1
        %v533 = vsel %vm532, 0.0, %v529
        %535 = vset.pattern.permute.xlu0 0
        %536 = vperm.xlu0 %535, %v533
        %v537 = vpop.permute.xlu0 %536
        %v539 = vmul.f32 %v537, %v355
        %540 = vset.pattern.permute.xlu0 1
        %541 = vperm.xlu0 %540, %v533
        %v542 = vpop.permute.xlu0 %541
        %v544 = vmul.f32 %v542, %v360
        %v545 = vadd.f32 %v539, %v544
        %v546 = vmul.f32 %v527, 0.9
        %vm547 = vcmask 261120
        %v549 = vsel %vm547, %v528, 0
        %551 = vmatprep.subr.mxu0 0.0
        %552 = vmatpush1.msra.mxu0 0.0
        %553 = vmatprep.subr.mxu0 0.0
        %554 = vmatpush1.msra.mxu0 0.0
        %555 = vmatprep.subr.mxu0 0.0
        %556 = vmatpush1.msra.mxu0 0.0
        %557 = vmatprep.subr.mxu0 0.0
        %558 = vmatpush1.msra.mxu0 0.0
        %559 = vmatprep.subr.mxu0 0.0
        %560 = vmatpush1.msra.mxu0 0.0
        %561 = vmatprep.subr.mxu0 0.0
        %562 = vmatpush1.msra.mxu0 0.0
        %563 = vmatprep.subr.mxu0 0.0
        %564 = vmatpush1.msra.mxu0 0.0
        %565 = vmatprep.subr.mxu0 0.0
        %566 = vmatpush1.msra.mxu0 0.0
        %567 = vmatprep.subr.mxu0 0.0
        %568 = vmatpush1.msra.mxu0 0.0
        %569 = vmatprep.subr.mxu0 0.0
        %570 = vmatpush1.msra.mxu0 0.0
        %571 = vmatprep.subr.mxu0 0.0
        %572 = vmatpush1.msra.mxu0 0.0
        %573 = vmatprep.subr.mxu0 0.0
        %574 = vmatpush1.msra.mxu0 0.0
        %575 = vmatprep.subr.mxu0 0.0
        %576 = vmatpush1.msra.mxu0 %v346
        %577 = vmatprep.subr.mxu0 0.0
        %578 = vmatpush1.msra.mxu0 %v345
        %579 = vmatprep.subr.mxu0 0.0
        %580 = vmatpush1.msra.mxu0 %v344
        %581 = vmatprep.subr.mxu0 0.0
        %582 = vmatpush1.msra.mxu0 %v343
        %583 = vmatprep.subr.mxu0 0.0
        %584 = vmatpush2.msra.mxu0 0.0
        %585 = vmatprep.subr.mxu0 0.0
        %586 = vmatpush2.msra.mxu0 0.0
        %587 = vmatprep.subr.mxu0 0.0
        %588 = vmatpush2.msra.mxu0 0.0
        %589 = vmatprep.subr.mxu0 0.0
        %590 = vmatpush2.msra.mxu0 0.0
        %591 = vmatprep.subr.mxu0 0.0
        %592 = vmatpush2.msra.mxu0 0.0
        %593 = vmatprep.subr.mxu0 0.0
        %594 = vmatpush2.msra.mxu0 0.0
        %595 = vmatprep.subr.mxu0 0.0
        %596 = vmatpush2.msra.mxu0 0.0
        %597 = vmatprep.subr.mxu0 0.0
        %598 = vmatpush2.msra.mxu0 0.0
        %599 = vmatprep.subr.mxu0 0.0
        %600 = vmatpush2.msra.mxu0 0.0
        %601 = vmatprep.subr.mxu0 0.0
        %602 = vmatpush2.msra.mxu0 0.0
        %603 = vmatprep.subr.mxu0 0.0
        %604 = vmatpush2.msra.mxu0 0.0
        %605 = vmatprep.subr.mxu0 0.0
        %606 = vmatpush2.msra.mxu0 0.0
        %607 = vmatprep.subr.mxu0 0.0
        %608 = vmatpush2.msra.mxu0 0.0
        %609 = vmatprep.subr.mxu0 0.0
        %610 = vmatpush2.msra.mxu0 0.0
        %611 = vmatprep.subr.mxu0 0.0
        %612 = vmatpush2.msra.mxu0 0.0
        %613 = vmatprep.subr.mxu0 0.0
        %614 = vmatpush2.msra.mxu0 0.0
        %615 = vmatprep.mubr.f32.mxu0 0.0
        %616 = vmatmul.mubr.f32.gmra.mxu0 %v549
        %v617 = vpop.f32.mrf.mxu0
        %v618 = vadd.f32 0.0, %v617
        %v619 = vpop.f32.mrf.mxu0
        %620 = vdwg.mxu0
        %v621 = vadd.f32 %v546, %v618
        %v622 = vadd.f32 %v621, %v545
        %v623 = vld [vmem:[%s328] sm:$0x3]
        %v624 = vadd.f32 %v622, %v623
        %v625 = vmax.f32 %v624, 0.0
        %v626 = vld [vmem:[%s334] sm:$0x3]
        %v627 = vadd.f32 %v529, %v626
        %v629 = vsel %vm547, %v625, 0
        %631 = vmatprep.subr.mxu0 0.0
        %632 = vmatpush1.msra.mxu0 0.0
        %633 = vmatprep.subr.mxu0 0.0
        %634 = vmatpush1.msra.mxu0 0.0
        %635 = vmatprep.subr.mxu0 0.0
        %636 = vmatpush1.msra.mxu0 0.0
        %637 = vmatprep.subr.mxu0 0.0
        %638 = vmatpush1.msra.mxu0 0.0
        %639 = vmatprep.subr.mxu0 0.0
        %640 = vmatpush1.msra.mxu0 0.0
        %641 = vmatprep.subr.mxu0 0.0
        %642 = vmatpush1.msra.mxu0 0.0
        %643 = vmatprep.subr.mxu0 0.0
        %644 = vmatpush1.msra.mxu0 0.0
        %645 = vmatprep.subr.mxu0 0.0
        %646 = vmatpush1.msra.mxu0 0.0
        %647 = vmatprep.subr.mxu0 0.0
        %648 = vmatpush1.msra.mxu0 0.0
        %649 = vmatprep.subr.mxu0 0.0
        %650 = vmatpush1.msra.mxu0 0.0
        %651 = vmatprep.subr.mxu0 0.0
        %652 = vmatpush1.msra.mxu0 0.0
        %653 = vmatprep.subr.mxu0 0.0
        %654 = vmatpush1.msra.mxu0 0.0
        %655 = vmatprep.subr.mxu0 0.0
        %656 = vmatpush1.msra.mxu0 %v350
        %657 = vmatprep.subr.mxu0 0.0
        %658 = vmatpush1.msra.mxu0 %v349
        %659 = vmatprep.subr.mxu0 0.0
        %660 = vmatpush1.msra.mxu0 %v348
        %661 = vmatprep.subr.mxu0 0.0
        %662 = vmatpush1.msra.mxu0 %v347
        %663 = vmatprep.subr.mxu0 0.0
        %664 = vmatpush2.msra.mxu0 0.0
        %665 = vmatprep.subr.mxu0 0.0
        %666 = vmatpush2.msra.mxu0 0.0
        %667 = vmatprep.subr.mxu0 0.0
        %668 = vmatpush2.msra.mxu0 0.0
        %669 = vmatprep.subr.mxu0 0.0
        %670 = vmatpush2.msra.mxu0 0.0
        %671 = vmatprep.subr.mxu0 0.0
        %672 = vmatpush2.msra.mxu0 0.0
        %673 = vmatprep.subr.mxu0 0.0
        %674 = vmatpush2.msra.mxu0 0.0
        %675 = vmatprep.subr.mxu0 0.0
        %676 = vmatpush2.msra.mxu0 0.0
        %677 = vmatprep.subr.mxu0 0.0
        %678 = vmatpush2.msra.mxu0 0.0
        %679 = vmatprep.subr.mxu0 0.0
        %680 = vmatpush2.msra.mxu0 0.0
        %681 = vmatprep.subr.mxu0 0.0
        %682 = vmatpush2.msra.mxu0 0.0
        %683 = vmatprep.subr.mxu0 0.0
        %684 = vmatpush2.msra.mxu0 0.0
        %685 = vmatprep.subr.mxu0 0.0
        %686 = vmatpush2.msra.mxu0 0.0
        %687 = vmatprep.subr.mxu0 0.0
        %688 = vmatpush2.msra.mxu0 0.0
        %689 = vmatprep.subr.mxu0 0.0
        %690 = vmatpush2.msra.mxu0 0.0
        %691 = vmatprep.subr.mxu0 0.0
        %692 = vmatpush2.msra.mxu0 0.0
        %693 = vmatprep.subr.mxu0 0.0
        %694 = vmatpush2.msra.mxu0 0.0
        %695 = vmatprep.mubr.f32.mxu0 0.0
        %696 = vmatmul.mubr.f32.gmra.mxu0 %v629
        %v697 = vpop.f32.mrf.mxu0
        %v698 = vadd.f32 0.0, %v697
        %v699 = vpop.f32.mrf.mxu0
        %700 = vdwg.mxu0
        %v701 = vsub.f32 %v627, %v698
        %vm702 = vcmask 254976
        %703 = vst.msk [vmem:[%s316] sm:$0x3] %vm702, %v625
        %vm704 = vcmask 9216
        %705 = vst.msk [vmem:[%s341] sm:$0x3] %vm704, %v701
        %707 = vset.pattern.permute.xlu0 0
        %708 = vperm.xlu0 %707, %v701
        %v709 = vpop.permute.xlu0 %708
        %v711 = vmul.f32 %v709, %v355
        %712 = vset.pattern.permute.xlu0 1
        %713 = vperm.xlu0 %712, %v701
        %v714 = vpop.permute.xlu0 %713
        %v716 = vmul.f32 %v714, %v360
        %v717 = vadd.f32 %v711, %v716
        %v718 = vmul.f32 %v624, 0.9
        %719 = vmatprep.subr.mxu0 0.0
        %720 = vmatpush1.msra.mxu0 0.0
        %721 = vmatprep.subr.mxu0 0.0
        %722 = vmatpush1.msra.mxu0 0.0
        %723 = vmatprep.subr.mxu0 0.0
        %724 = vmatpush1.msra.mxu0 0.0
        %725 = vmatprep.subr.mxu0 0.0
        %726 = vmatpush1.msra.mxu0 0.0
        %727 = vmatprep.subr.mxu0 0.0
        %728 = vmatpush1.msra.mxu0 0.0
        %729 = vmatprep.subr.mxu0 0.0
        %730 = vmatpush1.msra.mxu0 0.0
        %731 = vmatprep.subr.mxu0 0.0
        %732 = vmatpush1.msra.mxu0 0.0
        %733 = vmatprep.subr.mxu0 0.0
        %734 = vmatpush1.msra.mxu0 0.0
        %735 = vmatprep.subr.mxu0 0.0
        %736 = vmatpush1.msra.mxu0 0.0
        %737 = vmatprep.subr.mxu0 0.0
        %738 = vmatpush1.msra.mxu0 0.0
        %739 = vmatprep.subr.mxu0 0.0
        %740 = vmatpush1.msra.mxu0 0.0
        %741 = vmatprep.subr.mxu0 0.0
        %742 = vmatpush1.msra.mxu0 0.0
        %743 = vmatprep.subr.mxu0 0.0
        %744 = vmatpush1.msra.mxu0 %v346
        %745 = vmatprep.subr.mxu0 0.0
        %746 = vmatpush1.msra.mxu0 %v345
        %747 = vmatprep.subr.mxu0 0.0
        %748 = vmatpush1.msra.mxu0 %v344
        %749 = vmatprep.subr.mxu0 0.0
        %750 = vmatpush1.msra.mxu0 %v343
        %751 = vmatprep.subr.mxu0 0.0
        %752 = vmatpush2.msra.mxu0 0.0
        %753 = vmatprep.subr.mxu0 0.0
        %754 = vmatpush2.msra.mxu0 0.0
        %755 = vmatprep.subr.mxu0 0.0
        %756 = vmatpush2.msra.mxu0 0.0
        %757 = vmatprep.subr.mxu0 0.0
        %758 = vmatpush2.msra.mxu0 0.0
        %759 = vmatprep.subr.mxu0 0.0
        %760 = vmatpush2.msra.mxu0 0.0
        %761 = vmatprep.subr.mxu0 0.0
        %762 = vmatpush2.msra.mxu0 0.0
        %763 = vmatprep.subr.mxu0 0.0
        %764 = vmatpush2.msra.mxu0 0.0
        %765 = vmatprep.subr.mxu0 0.0
        %766 = vmatpush2.msra.mxu0 0.0
        %767 = vmatprep.subr.mxu0 0.0
        %768 = vmatpush2.msra.mxu0 0.0
        %769 = vmatprep.subr.mxu0 0.0
        %770 = vmatpush2.msra.mxu0 0.0
        %771 = vmatprep.subr.mxu0 0.0
        %772 = vmatpush2.msra.mxu0 0.0
        %773 = vmatprep.subr.mxu0 0.0
        %774 = vmatpush2.msra.mxu0 0.0
        %775 = vmatprep.subr.mxu0 0.0
        %776 = vmatpush2.msra.mxu0 0.0
        %777 = vmatprep.subr.mxu0 0.0
        %778 = vmatpush2.msra.mxu0 0.0
        %779 = vmatprep.subr.mxu0 0.0
        %780 = vmatpush2.msra.mxu0 0.0
        %781 = vmatprep.subr.mxu0 0.0
        %782 = vmatpush2.msra.mxu0 0.0
        %783 = vmatprep.mubr.f32.mxu0 0.0
        %784 = vmatmul.mubr.f32.gmra.mxu0 %v629
        %v785 = vpop.f32.mrf.mxu0
        %v786 = vadd.f32 0.0, %v785
        %v787 = vpop.f32.mrf.mxu0
        %788 = vdwg.mxu0
        %v789 = vadd.f32 %v718, %v786
        %v790 = vadd.f32 %v789, %v717
        %s791 = scalar_lea.vmem %s328, 2
        %v792 = vld [vmem:[%s791] sm:$0x3]
        %v793 = vadd.f32 %v790, %v792
        %v794 = vmax.f32 %v793, 0.0
        %s795 = scalar_lea.vmem %s334, 2
        %v796 = vld [vmem:[%s795] sm:$0x3]
        %v797 = vadd.f32 %v701, %v796
        %v799 = vsel %vm547, %v794, 0
        %801 = vmatprep.subr.mxu0 0.0
        %802 = vmatpush1.msra.mxu0 0.0
        %803 = vmatprep.subr.mxu0 0.0
        %804 = vmatpush1.msra.mxu0 0.0
        %805 = vmatprep.subr.mxu0 0.0
        %806 = vmatpush1.msra.mxu0 0.0
        %807 = vmatprep.subr.mxu0 0.0
        %808 = vmatpush1.msra.mxu0 0.0
        %809 = vmatprep.subr.mxu0 0.0
        %810 = vmatpush1.msra.mxu0 0.0
        %811 = vmatprep.subr.mxu0 0.0
        %812 = vmatpush1.msra.mxu0 0.0
        %813 = vmatprep.subr.mxu0 0.0
        %814 = vmatpush1.msra.mxu0 0.0
        %815 = vmatprep.subr.mxu0 0.0
        %816 = vmatpush1.msra.mxu0 0.0
        %817 = vmatprep.subr.mxu0 0.0
        %818 = vmatpush1.msra.mxu0 0.0
        %819 = vmatprep.subr.mxu0 0.0
        %820 = vmatpush1.msra.mxu0 0.0
        %821 = vmatprep.subr.mxu0 0.0
        %822 = vmatpush1.msra.mxu0 0.0
        %823 = vmatprep.subr.mxu0 0.0
        %824 = vmatpush1.msra.mxu0 0.0
        %825 = vmatprep.subr.mxu0 0.0
        %826 = vmatpush1.msra.mxu0 %v350
        %827 = vmatprep.subr.mxu0 0.0
        %828 = vmatpush1.msra.mxu0 %v349
        %829 = vmatprep.subr.mxu0 0.0
        %830 = vmatpush1.msra.mxu0 %v348
        %831 = vmatprep.subr.mxu0 0.0
        %832 = vmatpush1.msra.mxu0 %v347
        %833 = vmatprep.subr.mxu0 0.0
        %834 = vmatpush2.msra.mxu0 0.0
        %835 = vmatprep.subr.mxu0 0.0
        %836 = vmatpush2.msra.mxu0 0.0
        %837 = vmatprep.subr.mxu0 0.0
        %838 = vmatpush2.msra.mxu0 0.0
        %839 = vmatprep.subr.mxu0 0.0
        %840 = vmatpush2.msra.mxu0 0.0
        %841 = vmatprep.subr.mxu0 0.0
        %842 = vmatpush2.msra.mxu0 0.0
        %843 = vmatprep.subr.mxu0 0.0
        %844 = vmatpush2.msra.mxu0 0.0
        %845 = vmatprep.subr.mxu0 0.0
        %846 = vmatpush2.msra.mxu0 0.0
        %847 = vmatprep.subr.mxu0 0.0
        %848 = vmatpush2.msra.mxu0 0.0
        %849 = vmatprep.subr.mxu0 0.0
        %850 = vmatpush2.msra.mxu0 0.0
        %851 = vmatprep.subr.mxu0 0.0
        %852 = vmatpush2.msra.mxu0 0.0
        %853 = vmatprep.subr.mxu0 0.0
        %854 = vmatpush2.msra.mxu0 0.0
        %855 = vmatprep.subr.mxu0 0.0
        %856 = vmatpush2.msra.mxu0 0.0
        %857 = vmatprep.subr.mxu0 0.0
        %858 = vmatpush2.msra.mxu0 0.0
        %859 = vmatprep.subr.mxu0 0.0
        %860 = vmatpush2.msra.mxu0 0.0
        %861 = vmatprep.subr.mxu0 0.0
        %862 = vmatpush2.msra.mxu0 0.0
        %863 = vmatprep.subr.mxu0 0.0
        %864 = vmatpush2.msra.mxu0 0.0
        %865 = vmatprep.mubr.f32.mxu0 0.0
        %866 = vmatmul.mubr.f32.gmra.mxu0 %v799
        %v867 = vpop.f32.mrf.mxu0
        %v868 = vadd.f32 0.0, %v867
        %v869 = vpop.f32.mrf.mxu0
        %870 = vdwg.mxu0
        %v871 = vsub.f32 %v797, %v868
        %s872 = scalar_lea.vmem %s316, 2 [#allocation4]
        %873 = vst.msk [vmem:[%s872] sm:$0x3] %vm702, %v794
        %s874 = scalar_lea.vmem %s341, 2
        %875 = vst.msk [vmem:[%s874] sm:$0x3] %vm704, %v871
        %877 = vset.pattern.permute.xlu0 0
        %878 = vperm.xlu0 %877, %v871
        %v879 = vpop.permute.xlu0 %878
        %v881 = vmul.f32 %v879, %v355
        %882 = vset.pattern.permute.xlu0 1
        %883 = vperm.xlu0 %882, %v871
        %v884 = vpop.permute.xlu0 %883
        %v886 = vmul.f32 %v884, %v360
        %v887 = vadd.f32 %v881, %v886
        %v888 = vmul.f32 %v793, 0.9
        %889 = vmatprep.subr.mxu0 0.0
        %890 = vmatpush1.msra.mxu0 0.0
        %891 = vmatprep.subr.mxu0 0.0
        %892 = vmatpush1.msra.mxu0 0.0
        %893 = vmatprep.subr.mxu0 0.0
        %894 = vmatpush1.msra.mxu0 0.0
        %895 = vmatprep.subr.mxu0 0.0
        %896 = vmatpush1.msra.mxu0 0.0
        %897 = vmatprep.subr.mxu0 0.0
        %898 = vmatpush1.msra.mxu0 0.0
        %899 = vmatprep.subr.mxu0 0.0
        %900 = vmatpush1.msra.mxu0 0.0
        %901 = vmatprep.subr.mxu0 0.0
        %902 = vmatpush1.msra.mxu0 0.0
        %903 = vmatprep.subr.mxu0 0.0
        %904 = vmatpush1.msra.mxu0 0.0
        %905 = vmatprep.subr.mxu0 0.0
        %906 = vmatpush1.msra.mxu0 0.0
        %907 = vmatprep.subr.mxu0 0.0
        %908 = vmatpush1.msra.mxu0 0.0
        %909 = vmatprep.subr.mxu0 0.0
        %910 = vmatpush1.msra.mxu0 0.0
        %911 = vmatprep.subr.mxu0 0.0
        %912 = vmatpush1.msra.mxu0 0.0
        %913 = vmatprep.subr.mxu0 0.0
        %914 = vmatpush1.msra.mxu0 %v346
        %915 = vmatprep.subr.mxu0 0.0
        %916 = vmatpush1.msra.mxu0 %v345
        %917 = vmatprep.subr.mxu0 0.0
        %918 = vmatpush1.msra.mxu0 %v344
        %919 = vmatprep.subr.mxu0 0.0
        %920 = vmatpush1.msra.mxu0 %v343
        %921 = vmatprep.subr.mxu0 0.0
        %922 = vmatpush2.msra.mxu0 0.0
        %923 = vmatprep.subr.mxu0 0.0
        %924 = vmatpush2.msra.mxu0 0.0
        %925 = vmatprep.subr.mxu0 0.0
        %926 = vmatpush2.msra.mxu0 0.0
        %927 = vmatprep.subr.mxu0 0.0
        %928 = vmatpush2.msra.mxu0 0.0
        %929 = vmatprep.subr.mxu0 0.0
        %930 = vmatpush2.msra.mxu0 0.0
        %931 = vmatprep.subr.mxu0 0.0
        %932 = vmatpush2.msra.mxu0 0.0
        %933 = vmatprep.subr.mxu0 0.0
        %934 = vmatpush2.msra.mxu0 0.0
        %935 = vmatprep.subr.mxu0 0.0
        %936 = vmatpush2.msra.mxu0 0.0
        %937 = vmatprep.subr.mxu0 0.0
        %938 = vmatpush2.msra.mxu0 0.0
        %939 = vmatprep.subr.mxu0 0.0
        %940 = vmatpush2.msra.mxu0 0.0
        %941 = vmatprep.subr.mxu0 0.0
        %942 = vmatpush2.msra.mxu0 0.0
        %943 = vmatprep.subr.mxu0 0.0
        %944 = vmatpush2.msra.mxu0 0.0
        %945 = vmatprep.subr.mxu0 0.0
        %946 = vmatpush2.msra.mxu0 0.0
        %947 = vmatprep.subr.mxu0 0.0
        %948 = vmatpush2.msra.mxu0 0.0
        %949 = vmatprep.subr.mxu0 0.0
        %950 = vmatpush2.msra.mxu0 0.0
        %951 = vmatprep.subr.mxu0 0.0
        %952 = vmatpush2.msra.mxu0 0.0
        %953 = vmatprep.mubr.f32.mxu0 0.0
        %954 = vmatmul.mubr.f32.gmra.mxu0 %v799
        %v955 = vpop.f32.mrf.mxu0
        %v956 = vadd.f32 0.0, %v955
        %v957 = vpop.f32.mrf.mxu0
        %958 = vdwg.mxu0
        %v959 = vadd.f32 %v888, %v956
        %v960 = vadd.f32 %v959, %v887
        %s961 = scalar_lea.vmem %s328, 4
        %v962 = vld [vmem:[%s961] sm:$0x3]
        %v963 = vadd.f32 %v960, %v962
        %v964 = vmax.f32 %v963, 0.0
        %s965 = scalar_lea.vmem %s334, 4
        %v966 = vld [vmem:[%s965] sm:$0x3]
        %v967 = vadd.f32 %v871, %v966
        %v969 = vsel %vm547, %v964, 0
        %971 = vmatprep.subr.mxu0 0.0
        %972 = vmatpush1.msra.mxu0 0.0
        %973 = vmatprep.subr.mxu0 0.0
        %974 = vmatpush1.msra.mxu0 0.0
        %975 = vmatprep.subr.mxu0 0.0
        %976 = vmatpush1.msra.mxu0 0.0
        %977 = vmatprep.subr.mxu0 0.0
        %978 = vmatpush1.msra.mxu0 0.0
        %979 = vmatprep.subr.mxu0 0.0
        %980 = vmatpush1.msra.mxu0 0.0
        %981 = vmatprep.subr.mxu0 0.0
        %982 = vmatpush1.msra.mxu0 0.0
        %983 = vmatprep.subr.mxu0 0.0
        %984 = vmatpush1.msra.mxu0 0.0
        %985 = vmatprep.subr.mxu0 0.0
        %986 = vmatpush1.msra.mxu0 0.0
        %987 = vmatprep.subr.mxu0 0.0
        %988 = vmatpush1.msra.mxu0 0.0
        %989 = vmatprep.subr.mxu0 0.0
        %990 = vmatpush1.msra.mxu0 0.0
        %991 = vmatprep.subr.mxu0 0.0
        %992 = vmatpush1.msra.mxu0 0.0
        %993 = vmatprep.subr.mxu0 0.0
        %994 = vmatpush1.msra.mxu0 0.0
        %995 = vmatprep.subr.mxu0 0.0
        %996 = vmatpush1.msra.mxu0 %v350
        %997 = vmatprep.subr.mxu0 0.0
        %998 = vmatpush1.msra.mxu0 %v349
        %999 = vmatprep.subr.mxu0 0.0
        %1000 = vmatpush1.msra.mxu0 %v348
        %1001 = vmatprep.subr.mxu0 0.0
        %1002 = vmatpush1.msra.mxu0 %v347
        %1003 = vmatprep.subr.mxu0 0.0
        %1004 = vmatpush2.msra.mxu0 0.0
        %1005 = vmatprep.subr.mxu0 0.0
        %1006 = vmatpush2.msra.mxu0 0.0
        %1007 = vmatprep.subr.mxu0 0.0
        %1008 = vmatpush2.msra.mxu0 0.0
        %1009 = vmatprep.subr.mxu0 0.0
        %1010 = vmatpush2.msra.mxu0 0.0
        %1011 = vmatprep.subr.mxu0 0.0
        %1012 = vmatpush2.msra.mxu0 0.0
        %1013 = vmatprep.subr.mxu0 0.0
        %1014 = vmatpush2.msra.mxu0 0.0
        %1015 = vmatprep.subr.mxu0 0.0
        %1016 = vmatpush2.msra.mxu0 0.0
        %1017 = vmatprep.subr.mxu0 0.0
        %1018 = vmatpush2.msra.mxu0 0.0
        %1019 = vmatprep.subr.mxu0 0.0
        %1020 = vmatpush2.msra.mxu0 0.0
        %1021 = vmatprep.subr.mxu0 0.0
        %1022 = vmatpush2.msra.mxu0 0.0
        %1023 = vmatprep.subr.mxu0 0.0
        %1024 = vmatpush2.msra.mxu0 0.0
        %1025 = vmatprep.subr.mxu0 0.0
        %1026 = vmatpush2.msra.mxu0 0.0
        %1027 = vmatprep.subr.mxu0 0.0
        %1028 = vmatpush2.msra.mxu0 0.0
        %1029 = vmatprep.subr.mxu0 0.0
        %1030 = vmatpush2.msra.mxu0 0.0
        %1031 = vmatprep.subr.mxu0 0.0
        %1032 = vmatpush2.msra.mxu0 0.0
        %1033 = vmatprep.subr.mxu0 0.0
        %1034 = vmatpush2.msra.mxu0 0.0
        %1035 = vmatprep.mubr.f32.mxu0 0.0
        %1036 = vmatmul.mubr.f32.gmra.mxu0 %v969
        %v1037 = vpop.f32.mrf.mxu0
        %v1038 = vadd.f32 0.0, %v1037
        %v1039 = vpop.f32.mrf.mxu0
        %1040 = vdwg.mxu0
        %v1041 = vsub.f32 %v967, %v1038
        %s1042 = scalar_lea.vmem %s316, 4 [#allocation4]
        %1043 = vst.msk [vmem:[%s1042] sm:$0x3] %vm702, %v964
        %s1044 = scalar_lea.vmem %s341, 4
        %1045 = vst.msk [vmem:[%s1044] sm:$0x3] %vm704, %v1041
        %1047 = vset.pattern.permute.xlu0 0
        %1048 = vperm.xlu0 %1047, %v1041
        %v1049 = vpop.permute.xlu0 %1048
        %v1051 = vmul.f32 %v1049, %v355
        %1052 = vset.pattern.permute.xlu0 1
        %1053 = vperm.xlu0 %1052, %v1041
        %v1054 = vpop.permute.xlu0 %1053
        %v1056 = vmul.f32 %v1054, %v360
        %v1057 = vadd.f32 %v1051, %v1056
        %v1058 = vmul.f32 %v963, 0.9
        %1059 = vmatprep.subr.mxu0 0.0
        %1060 = vmatpush1.msra.mxu0 0.0
        %1061 = vmatprep.subr.mxu0 0.0
        %1062 = vmatpush1.msra.mxu0 0.0
        %1063 = vmatprep.subr.mxu0 0.0
        %1064 = vmatpush1.msra.mxu0 0.0
        %1065 = vmatprep.subr.mxu0 0.0
        %1066 = vmatpush1.msra.mxu0 0.0
        %1067 = vmatprep.subr.mxu0 0.0
        %1068 = vmatpush1.msra.mxu0 0.0
        %1069 = vmatprep.subr.mxu0 0.0
        %1070 = vmatpush1.msra.mxu0 0.0
        %1071 = vmatprep.subr.mxu0 0.0
        %1072 = vmatpush1.msra.mxu0 0.0
        %1073 = vmatprep.subr.mxu0 0.0
        %1074 = vmatpush1.msra.mxu0 0.0
        %1075 = vmatprep.subr.mxu0 0.0
        %1076 = vmatpush1.msra.mxu0 0.0
        %1077 = vmatprep.subr.mxu0 0.0
        %1078 = vmatpush1.msra.mxu0 0.0
        %1079 = vmatprep.subr.mxu0 0.0
        %1080 = vmatpush1.msra.mxu0 0.0
        %1081 = vmatprep.subr.mxu0 0.0
        %1082 = vmatpush1.msra.mxu0 0.0
        %1083 = vmatprep.subr.mxu0 0.0
        %1084 = vmatpush1.msra.mxu0 %v346
        %1085 = vmatprep.subr.mxu0 0.0
        %1086 = vmatpush1.msra.mxu0 %v345
        %1087 = vmatprep.subr.mxu0 0.0
        %1088 = vmatpush1.msra.mxu0 %v344
        %1089 = vmatprep.subr.mxu0 0.0
        %1090 = vmatpush1.msra.mxu0 %v343
        %1091 = vmatprep.subr.mxu0 0.0
        %1092 = vmatpush2.msra.mxu0 0.0
        %1093 = vmatprep.subr.mxu0 0.0
        %1094 = vmatpush2.msra.mxu0 0.0
        %1095 = vmatprep.subr.mxu0 0.0
        %1096 = vmatpush2.msra.mxu0 0.0
        %1097 = vmatprep.subr.mxu0 0.0
        %1098 = vmatpush2.msra.mxu0 0.0
        %1099 = vmatprep.subr.mxu0 0.0
        %1100 = vmatpush2.msra.mxu0 0.0
        %1101 = vmatprep.subr.mxu0 0.0
        %1102 = vmatpush2.msra.mxu0 0.0
        %1103 = vmatprep.subr.mxu0 0.0
        %1104 = vmatpush2.msra.mxu0 0.0
        %1105 = vmatprep.subr.mxu0 0.0
        %1106 = vmatpush2.msra.mxu0 0.0
        %1107 = vmatprep.subr.mxu0 0.0
        %1108 = vmatpush2.msra.mxu0 0.0
        %1109 = vmatprep.subr.mxu0 0.0
        %1110 = vmatpush2.msra.mxu0 0.0
        %1111 = vmatprep.subr.mxu0 0.0
        %1112 = vmatpush2.msra.mxu0 0.0
        %1113 = vmatprep.subr.mxu0 0.0
        %1114 = vmatpush2.msra.mxu0 0.0
        %1115 = vmatprep.subr.mxu0 0.0
        %1116 = vmatpush2.msra.mxu0 0.0
        %1117 = vmatprep.subr.mxu0 0.0
        %1118 = vmatpush2.msra.mxu0 0.0
        %1119 = vmatprep.subr.mxu0 0.0
        %1120 = vmatpush2.msra.mxu0 0.0
        %1121 = vmatprep.subr.mxu0 0.0
        %1122 = vmatpush2.msra.mxu0 0.0
        %1123 = vmatprep.mubr.f32.mxu0 0.0
        %1124 = vmatmul.mubr.f32.gmra.mxu0 %v969
        %v1125 = vpop.f32.mrf.mxu0
        %v1126 = vadd.f32 0.0, %v1125
        %v1127 = vpop.f32.mrf.mxu0
        %1128 = vdwg.mxu0
        %v1129 = vadd.f32 %v1058, %v1126
        %v1130 = vadd.f32 %v1129, %v1057
        %s1131 = scalar_lea.vmem %s328, 6
        %v1132 = vld [vmem:[%s1131] sm:$0x3]
        %v1133 = vadd.f32 %v1130, %v1132
        %v1134 = vmax.f32 %v1133, 0.0
        %s1135 = scalar_lea.vmem %s334, 6
        %v1136 = vld [vmem:[%s1135] sm:$0x3]
        %v1137 = vadd.f32 %v1041, %v1136
        %v1139 = vsel %vm547, %v1134, 0
        %1141 = vmatprep.subr.mxu0 0.0
        %1142 = vmatpush1.msra.mxu0 0.0
        %1143 = vmatprep.subr.mxu0 0.0
        %1144 = vmatpush1.msra.mxu0 0.0
        %1145 = vmatprep.subr.mxu0 0.0
        %1146 = vmatpush1.msra.mxu0 0.0
        %1147 = vmatprep.subr.mxu0 0.0
        %1148 = vmatpush1.msra.mxu0 0.0
        %1149 = vmatprep.subr.mxu0 0.0
        %1150 = vmatpush1.msra.mxu0 0.0
        %1151 = vmatprep.subr.mxu0 0.0
        %1152 = vmatpush1.msra.mxu0 0.0
        %1153 = vmatprep.subr.mxu0 0.0
        %1154 = vmatpush1.msra.mxu0 0.0
        %1155 = vmatprep.subr.mxu0 0.0
        %1156 = vmatpush1.msra.mxu0 0.0
        %1157 = vmatprep.subr.mxu0 0.0
        %1158 = vmatpush1.msra.mxu0 0.0
        %1159 = vmatprep.subr.mxu0 0.0
        %1160 = vmatpush1.msra.mxu0 0.0
        %1161 = vmatprep.subr.mxu0 0.0
        %1162 = vmatpush1.msra.mxu0 0.0
        %1163 = vmatprep.subr.mxu0 0.0
        %1164 = vmatpush1.msra.mxu0 0.0
        %1165 = vmatprep.subr.mxu0 0.0
        %1166 = vmatpush1.msra.mxu0 %v350
        %1167 = vmatprep.subr.mxu0 0.0
        %1168 = vmatpush1.msra.mxu0 %v349
        %1169 = vmatprep.subr.mxu0 0.0
        %1170 = vmatpush1.msra.mxu0 %v348
        %1171 = vmatprep.subr.mxu0 0.0
        %1172 = vmatpush1.msra.mxu0 %v347
        %1173 = vmatprep.subr.mxu0 0.0
        %1174 = vmatpush2.msra.mxu0 0.0
        %1175 = vmatprep.subr.mxu0 0.0
        %1176 = vmatpush2.msra.mxu0 0.0
        %1177 = vmatprep.subr.mxu0 0.0
        %1178 = vmatpush2.msra.mxu0 0.0
        %1179 = vmatprep.subr.mxu0 0.0
        %1180 = vmatpush2.msra.mxu0 0.0
        %1181 = vmatprep.subr.mxu0 0.0
        %1182 = vmatpush2.msra.mxu0 0.0
        %1183 = vmatprep.subr.mxu0 0.0
        %1184 = vmatpush2.msra.mxu0 0.0
        %1185 = vmatprep.subr.mxu0 0.0
        %1186 = vmatpush2.msra.mxu0 0.0
        %1187 = vmatprep.subr.mxu0 0.0
        %1188 = vmatpush2.msra.mxu0 0.0
        %1189 = vmatprep.subr.mxu0 0.0
        %1190 = vmatpush2.msra.mxu0 0.0
        %1191 = vmatprep.subr.mxu0 0.0
        %1192 = vmatpush2.msra.mxu0 0.0
        %1193 = vmatprep.subr.mxu0 0.0
        %1194 = vmatpush2.msra.mxu0 0.0
        %1195 = vmatprep.subr.mxu0 0.0
        %1196 = vmatpush2.msra.mxu0 0.0
        %1197 = vmatprep.subr.mxu0 0.0
        %1198 = vmatpush2.msra.mxu0 0.0
        %1199 = vmatprep.subr.mxu0 0.0
        %1200 = vmatpush2.msra.mxu0 0.0
        %1201 = vmatprep.subr.mxu0 0.0
        %1202 = vmatpush2.msra.mxu0 0.0
        %1203 = vmatprep.subr.mxu0 0.0
        %1204 = vmatpush2.msra.mxu0 0.0
        %1205 = vmatprep.mubr.f32.mxu0 0.0
        %1206 = vmatmul.mubr.f32.gmra.mxu0 %v1139
        %v1207 = vpop.f32.mrf.mxu0
        %v1208 = vadd.f32 0.0, %v1207
        %v1209 = vpop.f32.mrf.mxu0
        %1210 = vdwg.mxu0
        %v1211 = vsub.f32 %v1137, %v1208
        %s1212 = scalar_lea.vmem %s316, 6 [#allocation4]
        %1213 = vst.msk [vmem:[%s1212] sm:$0x3] %vm702, %v1134
        %s1214 = scalar_lea.vmem %s341, 6
        %1215 = vst.msk [vmem:[%s1214] sm:$0x3] %vm704, %v1211
        %1216 = vst.msk [vmem:[#allocation2] sm:$0x3] %vm702, %v1133
        %1217 = vst.msk [vmem:[#allocation3] sm:$0x3] %vm704, %v1211
        %s1218 = sand.u32 %s188, 1
        %s1219 = scalar_lea.sflag [#allocation5], %s1218
        %s1220 = sand.u32 %s188, 1
        %s1221 = smul.addr %s1220, 8
        %s1222 = scalar_lea.vmem [#allocation4], %s1221
        %s1223 = smul.u32 4, %s23
        %p1224 = scmp.lt.s32.totalorder %s1223, 7
        %s1225 = scalar_select %p1224, %s1223, 7
        %s1226 = smul.addr %s1225, 2
        %s1227 = scalar_lea.vmem %s8, %s1226
        // Predicated region
        $region53: #{tpu_custom_call.1} parent=47 // pred_check
          %p1228 = pneg %p198
        $region54: #{tpu_custom_call.1} parent=47 // pred_check_branch
          %1230 = sbr.rel (%p1228) target = $region56
        $region55: #{tpu_custom_call.1} parent=47 // pred_region
          %s1231 = smul.u32 4, %s23
          %s1233 = ssub.s32 128, 128
          %1234 = vsyncadd %s1219, %s1233
          %s1235 = smul.addr %s1231, 32
          %s1236 = scalar_lea.hbm %s7, %s1235
          %s1237 = sshll.u32 %s1222, 4
          %s1238 = int_to_ptr.vmem [resolvable:$true] %s1237
          %1243 = dma.vmem_to_hbm [thread:$0]  %s1238, 128, %s1236, %s1219, 32, 32, 2
        $region56: #{tpu_custom_call.1} parent=47 // pred_fallthru
          _
        // Predicated region
        $region57: #{tpu_custom_call.1} parent=47 // pred_check
          %p1244 = pneg %p224
        $region58: #{tpu_custom_call.1} parent=47 // pred_check_branch
          %1246 = sbr.rel (%p1244) target = $region60
        $region59: #{tpu_custom_call.1} parent=47 // pred_region
          %s1247 = smul.u32 4, %s23
        $region60: #{tpu_custom_call.1} parent=47 // pred_fallthru
          _
      $region48: #{tpu_custom_call.1} parent=5 // pred_fallthru
        _
      %p1248 = scmp.le.s32.totalorder 2, %s18
      // Predicated region
      $region61: #{tpu_custom_call.1} parent=5 // pred_check
        %p1249 = pneg %p1248
      $region62: #{tpu_custom_call.1} parent=5 // pred_check_branch
        %1251 = sbr.rel (%p1249) target = $region64
      $region63: #{tpu_custom_call.1} parent=5 // pred_region
        %s1252 = ssub.s32 %s18, 2
        // Predicated region
        $region65: #{tpu_custom_call.1} parent=63 // pred_check
          %p1253 = pneg %p204
        $region66: #{tpu_custom_call.1} parent=63 // pred_check_branch
          %1255 = sbr.rel (%p1253) target = $region68
        $region67: #{tpu_custom_call.1} parent=63 // pred_region
          %s1256 = sand.u32 %s189, 1
          %s1257 = scalar_lea.sflag [#allocation5], %s1256
          %s1258 = sand.u32 %s189, 1
          %s1259 = smul.addr %s1258, 8
          %s1260 = scalar_lea.vmem [#allocation4], %s1259
          %1261 = dma.done %s1257, 128
        $region68: #{tpu_custom_call.1} parent=63 // pred_fallthru
          _
        // Predicated region
        $region69: #{tpu_custom_call.1} parent=63 // pred_check
          %p1262 = pneg %p230
        $region70: #{tpu_custom_call.1} parent=63 // pred_check_branch
          %1264 = sbr.rel (%p1262) target = $region72
        $region71: #{tpu_custom_call.1} parent=63 // pred_region
          %s1265 = smul.u32 4, %s24
          %p1266 = scmp.lt.s32.totalorder %s1265, 7
          %s1267 = scalar_select %p1266, %s1265, 7
          %s1268 = smul.addr %s1267, 2
          %s1269 = scalar_lea.vmem %s8, %s1268
        $region72: #{tpu_custom_call.1} parent=63 // pred_fallthru
          _
      $region64: #{tpu_custom_call.1} parent=5 // pred_fallthru
        _
    $region6: #{tpu_custom_call.1} parent=1 // loop_footer
      %s22 = sadd.s32 1, %s18
    $region7: #{tpu_custom_call.1} parent=1 // loop_footer_branch
      %17 = sbr.rel target = $region3
    $region8: #{tpu_custom_call.1} parent=1 // loop_exit
      _
    %1270 = vsyncpa [#allocation5], 1
    %s1271 = scalar_lea.sflag [#allocation5], 1
    %1272 = vsyncpa %s1271, 1

</llo_original>
